<compile_context>
chip_gen: v6e
topology: v6e:2x2x1
jax: 0.10.0
libtpu: 0.0.40
codegen_flags: <defaults>
</compile_context>

<pallas_src>
import functools

import jax
import jax.numpy as jnp
from jax.experimental import pallas as pl
from jax.experimental.pallas import tpu as pltpu

HID = 128            # num_lstm_out
EA_S = 64            # ExternalAttention S
C1, C2, C3 = 128, 256, 128
K1, K2, K3 = 7, 5, 3
PAD1 = PAD2 = PAD3 = 2
BN_EPS = 1e-5

_WEIGHT_ORDER = ("w1", "sh1", "se1a", "se1b", "w2", "sh2", "se2a", "se2b",
                 "w3", "sh3", "fc_w2", "fc_b")


# ------------------------------ fused kernel ------------------------------- #

def _mlstm_kernel(x_ref,                                   # (1, ni, 1)
                  w1_ref, sh1_ref, s1a_ref, s1b_ref,
                  w2_ref, sh2_ref, s2a_ref, s2b_ref,
                  w3_ref, sh3_ref, fcw_ref, fcb_ref,
                  out_ref,                                 # (1, 1, nf)
                  xpad_ref, p1_ref, p2_ref,                # VMEM scratch
                  *, ni, L1, L2, L3):
    f32, bf16 = jnp.float32, jnp.bfloat16

    # ---- conv1 + BN + ReLU (C_in = 1): VPU broadcast MAC over the K1 taps ----
    xpad_ref[...] = jnp.zeros_like(xpad_ref)                       # zero pad halo
    xpad_ref[PAD1:PAD1 + ni, :] = x_ref[0]                         # (ni, 1)
    acc1 = jnp.zeros((L1, C1), f32)
    for k in range(K1):                                            # unrolled
        acc1 = acc1 + xpad_ref[k:k + L1, :] * w1_ref[k:k + 1, :]   # (L1,1)*(1,C1)
    y1 = jnp.maximum(acc1 + sh1_ref[...], 0.0)                     # dropout(eval)=id

    # ---- SE1: max-pool over L -> FC -> ReLU -> FC -> sigmoid -> scale ----
    pool1 = jnp.max(y1, axis=0, keepdims=True)                     # (1, C1)
    h1 = jnp.maximum(jnp.dot(pool1.astype(bf16), s1a_ref[...],
                             preferred_element_type=f32), 0.0)
    g1 = jax.nn.sigmoid(jnp.dot(h1.astype(bf16), s1b_ref[...],
                                preferred_element_type=f32))
    z1 = y1 * g1

    # ---- conv2 + BN + ReLU: K2 shifted-slice matmuls (bf16 MXU, f32 acc) ----
    p1_ref[...] = jnp.zeros_like(p1_ref)
    p1_ref[PAD2:PAD2 + L1, :] = z1
    acc2 = jnp.zeros((L2, C2), f32)
    for k in range(K2):
        acc2 = acc2 + jnp.dot(p1_ref[k:k + L2, :].astype(bf16), w2_ref[k],
                              preferred_element_type=f32)
    y2 = jnp.maximum(acc2 + sh2_ref[...], 0.0)

    # ---- SE2 ----
    pool2 = jnp.max(y2, axis=0, keepdims=True)                     # (1, C2)
    h2 = jnp.maximum(jnp.dot(pool2.astype(bf16), s2a_ref[...],
                             preferred_element_type=f32), 0.0)
    g2 = jax.nn.sigmoid(jnp.dot(h2.astype(bf16), s2b_ref[...],
                                preferred_element_type=f32))
    z2 = y2 * g2

    # ---- conv3 + BN + ReLU ----
    p2_ref[...] = jnp.zeros_like(p2_ref)
    p2_ref[PAD3:PAD3 + L2, :] = z2
    acc3 = jnp.zeros((L3, C3), f32)
    for k in range(K3):
        acc3 = acc3 + jnp.dot(p2_ref[k:k + L3, :].astype(bf16), w3_ref[k],
                              preferred_element_type=f32)
    y3 = jnp.maximum(acc3 + sh3_ref[...], 0.0)

    # ---- head: mean over L, fc (conv half; LSTM/EA half is folded into the
    #      bias at init), log_softmax over classes ----
    x2m = jnp.mean(y3, axis=0, keepdims=True)                      # (1, C3)
    logits = jnp.dot(x2m.astype(bf16), fcw_ref[...],
                     preferred_element_type=f32) + fcb_ref[...]
    m = jnp.max(logits, axis=1, keepdims=True)
    lse = m + jnp.log(jnp.sum(jnp.exp(logits - m), axis=1, keepdims=True))
    out_ref[0] = logits - lse


# ------------------------------ JAX wrapper -------------------------------- #

def mlstm_forward(params, x):
    """x: (B, T=1, ni), matching torch batch_first LSTM / Conv1d(1, ...) input."""
    B, T, ni = x.shape
    assert T == 1, "Conv1d(in_channels=1) forces seq_len == 1"
    L1 = ni + 2 * PAD1 - K1 + 1
    L2 = L1 + 2 * PAD2 - K2 + 1
    L3 = L2 + 2 * PAD3 - K3 + 1
    nf = params["fc_w2"].shape[1]

    weights = [params[k] for k in _WEIGHT_ORDER]
    x_cl = x.reshape(B, ni, 1)        # free reshape: channels-last (L=ni, C_in=1)

    def _full(a):                     # whole-array block, constant index map
        nd = a.ndim
        return pl.BlockSpec(a.shape, lambda b, _nd=nd: (0,) * _nd)

    kernel = functools.partial(_mlstm_kernel, ni=ni, L1=L1, L2=L2, L3=L3)
    out = pl.pallas_call(
        kernel,
        out_shape=jax.ShapeDtypeStruct((B, 1, nf), jnp.float32),
        grid_spec=pltpu.PrefetchScalarGridSpec(
            num_scalar_prefetch=0,
            grid=(B,),                                        # one example / step
            in_specs=[pl.BlockSpec((1, ni, 1), lambda b: (b, 0, 0))]
                     + [_full(a) for a in weights],
            out_specs=pl.BlockSpec((1, 1, nf), lambda b: (b, 0, 0)),
            scratch_shapes=[
                pltpu.VMEM((ni + 2 * PAD1, 1), jnp.float32),   # padded conv1 input
                pltpu.VMEM((L1 + 2 * PAD2, C1), jnp.float32),  # padded conv2 input
                pltpu.VMEM((L2 + 2 * PAD3, C2), jnp.float32),  # padded conv3 input
            ]),
        compiler_params=pltpu.CompilerParams(
            dimension_semantics=("parallel",)),                # megacore on v7x
    )(x_cl, *weights)
    return out.reshape(B, nf)


# ------------------------------ parameters --------------------------------- #

def init_params(key, ni, nf):
    ks = iter(jax.random.split(key, 16))

    def nrm(shape, s=0.1):
        return s * jax.random.normal(next(ks), shape, jnp.float32)

    # --- LSTM + ExternalAttention branch: constant for T == 1 ----------------
    # EA softmax is over dim=1 (length).  With T == 1 it is identically 1, and
    # attn / attn.sum(dim=2) then makes every entry 1/S, so
    #   x1 = mean_s W_mv[:, s]     (independent of x, the LSTM and W_mk).
    # Fold x1 @ fc_w[:HID] into the fc bias; LSTM / W_mk weights are dead.
    # TODO(synk): for seq_len > 1 the LSTM recurrence (W_hh loop) and the real
    # EA softmax over time must be computed in-kernel.
    ea_wv = nrm((EA_S, HID))                                # = W_mv.T
    x1_const = jnp.mean(ea_wv, axis=0, keepdims=True)       # (1, HID)

    # --- Conv blocks: fold BatchNorm (eval, running stats) into weights ------
    def conv_bn(cin, cout, K):
        w = nrm((cout, cin, K))                             # torch Conv1d layout
        b = nrm((cout,))
        gamma = jnp.ones((cout,), jnp.float32)
        beta = jnp.zeros((cout,), jnp.float32)
        mean = jnp.zeros((cout,), jnp.float32)
        var = jnp.ones((cout,), jnp.float32)
        s = gamma / jnp.sqrt(var + BN_EPS)
        w_cl = jnp.transpose(w, (2, 1, 0)) * s[None, None, :]   # (K, Cin, Cout)
        shift = ((b - mean) * s + beta).reshape(1, cout)        # conv bias + BN
        return w_cl, shift

    w1, sh1 = conv_bn(1, C1, K1)
    w2, sh2 = conv_bn(C1, C2, K2)
    w3, sh3 = conv_bn(C2, C3, K3)

    fc_w = nrm((HID + C3, nf))      # = fc.weight.T; rows [:HID] act on LSTM/EA branch
    fc_b = nrm((1, nf))

    return {
        "w1": w1[:, 0, :],                              # (K1, C1) f32 (VPU path)
        "sh1": sh1,
        "w2": w2.astype(jnp.bfloat16), "sh2": sh2,      # bf16 MXU operands
        "w3": w3.astype(jnp.bfloat16), "sh3": sh3,
        "se1a": nrm((C1, C1 // 16)).astype(jnp.bfloat16),
        "se1b": nrm((C1 // 16, C1)).astype(jnp.bfloat16),
        "se2a": nrm((C2, C2 // 16)).astype(jnp.bfloat16),
        "se2b": nrm((C2 // 16, C2)).astype(jnp.bfloat16),
        "fc_w2": fc_w[HID:].astype(jnp.bfloat16),       # (C3, nf)
        "fc_b": fc_b + x1_const @ fc_w[:HID],           # folded LSTM/EA constant
    }


# --------------------------- pure-jnp reference ----------------------------- #

def mlstm_reference(params, x):
    """Plain-jnp replica of the fused kernel math (same packed/folded weights)."""
    B, T, ni = x.shape
    f32, bf16 = jnp.float32, jnp.bfloat16
    xb = x.reshape(B, ni)
    L1 = ni + 2 * PAD1 - K1 + 1

    xpad = jnp.pad(xb, ((0, 0), (PAD1, PAD1)))
    acc1 = jnp.zeros((B, L1, C1), f32)
    for k in range(K1):
        acc1 = acc1 + xpad[:, k:k + L1, None] * params["w1"][k][None, None, :]
    y1 = jnp.maximum(acc1 + params["sh1"][None], 0.0)

    def se(a, wa, wb):
        pool = jnp.max(a, axis=1)
        h = jnp.maximum(jnp.dot(pool.astype(bf16), wa, preferred_element_type=f32), 0.0)
        g = jax.nn.sigmoid(jnp.dot(h.astype(bf16), wb, preferred_element_type=f32))
        return a * g[:, None, :]

    def conv(a, w, shift, pad):
        K = w.shape[0]
        Lo = a.shape[1] + 2 * pad - K + 1
        ap = jnp.pad(a, ((0, 0), (pad, pad), (0, 0)))
        acc = jnp.zeros((B, Lo, w.shape[2]), f32)
        for k in range(K):
            acc = acc + jnp.einsum("blc,cd->bld", ap[:, k:k + Lo, :].astype(bf16),
                                   w[k], preferred_element_type=f32)
        return jnp.maximum(acc + shift[None], 0.0)

    z1 = se(y1, params["se1a"], params["se1b"])
    y2 = conv(z1, params["w2"], params["sh2"], PAD2)
    z2 = se(y2, params["se2a"], params["se2b"])
    y3 = conv(z2, params["w3"], params["sh3"], PAD3)
    x2m = jnp.mean(y3, axis=1)
    logits = jnp.dot(x2m.astype(bf16), params["fc_w2"],
                     preferred_element_type=f32) + params["fc_b"]
    return jax.nn.log_softmax(logits, axis=1)


if __name__ == "__main__":
    key = jax.random.PRNGKey(0)
    kp, kx = jax.random.split(key)
    B, ni, nf = 2, 16, 10
    params = init_params(kp, ni, nf)
    x = jax.random.normal(kx, (B, 1, ni), jnp.float32)   # (batch, seq=1, features)

    out = jax.block_until_ready(jax.jit(mlstm_forward)(params, x))
    assert out.shape == (B, nf) and out.dtype == jnp.float32
    # log_softmax rows must sum to 1 in probability space
    assert bool(jnp.all(jnp.abs(jnp.sum(jnp.exp(out), axis=1) - 1.0) < 1e-4))
    # and match the pure-jnp reference built from the same packed weights
    ref = mlstm_reference(params, x)
    assert bool(jnp.max(jnp.abs(out - ref)) < 1e-2)
    print("KERNEL_OK")
</pallas_src>

<mosaic_0001>
module attributes {stable_mosaic.version = 11 : i64} {
  func.func @_mlstm_kernel(%arg0: i32, %arg1: memref<1x16x1xf32, #tpu.memory_space<vmem>>, %arg2: memref<7x128xf32, #tpu.memory_space<vmem>>, %arg3: memref<1x128xf32, #tpu.memory_space<vmem>>, %arg4: memref<128x8xbf16, #tpu.memory_space<vmem>>, %arg5: memref<8x128xbf16, #tpu.memory_space<vmem>>, %arg6: memref<5x128x256xbf16, #tpu.memory_space<vmem>>, %arg7: memref<1x256xf32, #tpu.memory_space<vmem>>, %arg8: memref<256x16xbf16, #tpu.memory_space<vmem>>, %arg9: memref<16x256xbf16, #tpu.memory_space<vmem>>, %arg10: memref<3x256x128xbf16, #tpu.memory_space<vmem>>, %arg11: memref<1x128xf32, #tpu.memory_space<vmem>>, %arg12: memref<128x10xbf16, #tpu.memory_space<vmem>>, %arg13: memref<1x10xf32, #tpu.memory_space<vmem>>, %arg14: memref<1x1x10xf32, #tpu.memory_space<vmem>>, %arg15: memref<20x1xf32, #tpu.memory_space<vmem>>, %arg16: memref<18x128xf32, #tpu.memory_space<vmem>>, %arg17: memref<18x256xf32, #tpu.memory_space<vmem>>) attributes {dimension_semantics = [#tpu.dimension_semantics<parallel>], iteration_bounds = array<i64: 2>, scalar_prefetch = 0 : i64, scratch_operands = 3 : i64, tpu.core_type = #tpu.core_type<tc>, window_params = [{transform_indices = @transform_0, window_bounds = array<i64: 1, 16, 1>}, {pipeline_mode = #tpu.pipeline_mode<synchronous>, transform_indices = @transform_1, window_bounds = array<i64: 7, 128>}, {pipeline_mode = #tpu.pipeline_mode<synchronous>, transform_indices = @transform_2, window_bounds = array<i64: 1, 128>}, {pipeline_mode = #tpu.pipeline_mode<synchronous>, transform_indices = @transform_3, window_bounds = array<i64: 128, 8>}, {pipeline_mode = #tpu.pipeline_mode<synchronous>, transform_indices = @transform_4, window_bounds = array<i64: 8, 128>}, {pipeline_mode = #tpu.pipeline_mode<synchronous>, transform_indices = @transform_5, window_bounds = array<i64: 5, 128, 256>}, {pipeline_mode = #tpu.pipeline_mode<synchronous>, transform_indices = @transform_6, window_bounds = array<i64: 1, 256>}, {pipeline_mode = #tpu.pipeline_mode<synchronous>, transform_indices = @transform_7, window_bounds = array<i64: 256, 16>}, {pipeline_mode = #tpu.pipeline_mode<synchronous>, transform_indices = @transform_8, window_bounds = array<i64: 16, 256>}, {pipeline_mode = #tpu.pipeline_mode<synchronous>, transform_indices = @transform_9, window_bounds = array<i64: 3, 256, 128>}, {pipeline_mode = #tpu.pipeline_mode<synchronous>, transform_indices = @transform_10, window_bounds = array<i64: 1, 128>}, {pipeline_mode = #tpu.pipeline_mode<synchronous>, transform_indices = @transform_11, window_bounds = array<i64: 128, 10>}, {pipeline_mode = #tpu.pipeline_mode<synchronous>, transform_indices = @transform_12, window_bounds = array<i64: 1, 10>}, {transform_indices = @transform_13, window_bounds = array<i64: 1, 1, 10>}]} {
    %cst = arith.constant 0.000000e+00 : f32
    %0 = vector.broadcast %cst : f32 to vector<20x1xf32>
    %c0 = arith.constant 0 : index
    %c0_0 = arith.constant 0 : index
    %1 = vector.load %arg15[%c0, %c0_0] : memref<20x1xf32, #tpu.memory_space<vmem>>, vector<20x1xf32>
    tpu.vector_store %arg15[%c0, %c0_0], %0 {strides = array<i32>} : memref<20x1xf32, #tpu.memory_space<vmem>>, vector<20x1xf32>,
    %c0_1 = arith.constant 0 : index
    %c0_2 = arith.constant 0 : index
    %c0_3 = arith.constant 0 : index
    %2 = vector.load %arg1[%c0_1, %c0_2, %c0_3] : memref<1x16x1xf32, #tpu.memory_space<vmem>>, vector<1x16x1xf32>
    %3 = vector.shape_cast %2 : vector<1x16x1xf32> to vector<16x1xf32>
    %c2 = arith.constant 2 : index
    %c0_4 = arith.constant 0 : index
    %4 = vector.load %arg15[%c2, %c0_4] : memref<20x1xf32, #tpu.memory_space<vmem>>, vector<16x1xf32>
    tpu.vector_store %arg15[%c2, %c0_4], %3 {strides = array<i32>} : memref<20x1xf32, #tpu.memory_space<vmem>>, vector<16x1xf32>,
    %cst_5 = arith.constant 0.000000e+00 : f32
    %5 = vector.broadcast %cst_5 : f32 to vector<14x128xf32>
    %c0_6 = arith.constant 0 : index
    %c0_7 = arith.constant 0 : index
    %6 = vector.load %arg15[%c0_6, %c0_7] : memref<20x1xf32, #tpu.memory_space<vmem>>, vector<14x1xf32>
    %c0_8 = arith.constant 0 : index
    %c0_9 = arith.constant 0 : index
    %7 = vector.load %arg2[%c0_8, %c0_9] : memref<7x128xf32, #tpu.memory_space<vmem>>, vector<1x128xf32>
    %8 = vector.broadcast %6 : vector<14x1xf32> to vector<14x128xf32>
    %9 = vector.broadcast %7 : vector<1x128xf32> to vector<14x128xf32>
    %10 = arith.mulf %8, %9 : vector<14x128xf32>
    %11 = arith.addf %5, %10 : vector<14x128xf32>
    %c1 = arith.constant 1 : index
    %c0_10 = arith.constant 0 : index
    %12 = vector.load %arg15[%c1, %c0_10] : memref<20x1xf32, #tpu.memory_space<vmem>>, vector<14x1xf32>
    %c1_11 = arith.constant 1 : index
    %c0_12 = arith.constant 0 : index
    %13 = vector.load %arg2[%c1_11, %c0_12] : memref<7x128xf32, #tpu.memory_space<vmem>>, vector<1x128xf32>
    %14 = vector.broadcast %12 : vector<14x1xf32> to vector<14x128xf32>
    %15 = vector.broadcast %13 : vector<1x128xf32> to vector<14x128xf32>
    %16 = arith.mulf %14, %15 : vector<14x128xf32>
    %17 = arith.addf %11, %16 : vector<14x128xf32>
    %c2_13 = arith.constant 2 : index
    %c0_14 = arith.constant 0 : index
    %18 = vector.load %arg15[%c2_13, %c0_14] : memref<20x1xf32, #tpu.memory_space<vmem>>, vector<14x1xf32>
    %c2_15 = arith.constant 2 : index
    %c0_16 = arith.constant 0 : index
    %19 = vector.load %arg2[%c2_15, %c0_16] : memref<7x128xf32, #tpu.memory_space<vmem>>, vector<1x128xf32>
    %20 = vector.broadcast %18 : vector<14x1xf32> to vector<14x128xf32>
    %21 = vector.broadcast %19 : vector<1x128xf32> to vector<14x128xf32>
    %22 = arith.mulf %20, %21 : vector<14x128xf32>
    %23 = arith.addf %17, %22 : vector<14x128xf32>
    %c3 = arith.constant 3 : index
    %c0_17 = arith.constant 0 : index
    %24 = vector.load %arg15[%c3, %c0_17] : memref<20x1xf32, #tpu.memory_space<vmem>>, vector<14x1xf32>
    %c3_18 = arith.constant 3 : index
    %c0_19 = arith.constant 0 : index
    %25 = vector.load %arg2[%c3_18, %c0_19] : memref<7x128xf32, #tpu.memory_space<vmem>>, vector<1x128xf32>
    %26 = vector.broadcast %24 : vector<14x1xf32> to vector<14x128xf32>
    %27 = vector.broadcast %25 : vector<1x128xf32> to vector<14x128xf32>
    %28 = arith.mulf %26, %27 : vector<14x128xf32>
    %29 = arith.addf %23, %28 : vector<14x128xf32>
    %c4 = arith.constant 4 : index
    %c0_20 = arith.constant 0 : index
    %30 = vector.load %arg15[%c4, %c0_20] : memref<20x1xf32, #tpu.memory_space<vmem>>, vector<14x1xf32>
    %c4_21 = arith.constant 4 : index
    %c0_22 = arith.constant 0 : index
    %31 = vector.load %arg2[%c4_21, %c0_22] : memref<7x128xf32, #tpu.memory_space<vmem>>, vector<1x128xf32>
    %32 = vector.broadcast %30 : vector<14x1xf32> to vector<14x128xf32>
    %33 = vector.broadcast %31 : vector<1x128xf32> to vector<14x128xf32>
    %34 = arith.mulf %32, %33 : vector<14x128xf32>
    %35 = arith.addf %29, %34 : vector<14x128xf32>
    %c5 = arith.constant 5 : index
    %c0_23 = arith.constant 0 : index
    %36 = vector.load %arg15[%c5, %c0_23] : memref<20x1xf32, #tpu.memory_space<vmem>>, vector<14x1xf32>
    %c5_24 = arith.constant 5 : index
    %c0_25 = arith.constant 0 : index
    %37 = vector.load %arg2[%c5_24, %c0_25] : memref<7x128xf32, #tpu.memory_space<vmem>>, vector<1x128xf32>
    %38 = vector.broadcast %36 : vector<14x1xf32> to vector<14x128xf32>
    %39 = vector.broadcast %37 : vector<1x128xf32> to vector<14x128xf32>
    %40 = arith.mulf %38, %39 : vector<14x128xf32>
    %41 = arith.addf %35, %40 : vector<14x128xf32>
    %c6 = arith.constant 6 : index
    %c0_26 = arith.constant 0 : index
    %42 = vector.load %arg15[%c6, %c0_26] : memref<20x1xf32, #tpu.memory_space<vmem>>, vector<14x1xf32>
    %c6_27 = arith.constant 6 : index
    %c0_28 = arith.constant 0 : index
    %43 = vector.load %arg2[%c6_27, %c0_28] : memref<7x128xf32, #tpu.memory_space<vmem>>, vector<1x128xf32>
    %44 = vector.broadcast %42 : vector<14x1xf32> to vector<14x128xf32>
    %45 = vector.broadcast %43 : vector<1x128xf32> to vector<14x128xf32>
    %46 = arith.mulf %44, %45 : vector<14x128xf32>
    %47 = arith.addf %41, %46 : vector<14x128xf32>
    %c0_29 = arith.constant 0 : index
    %c0_30 = arith.constant 0 : index
    %48 = vector.load %arg3[%c0_29, %c0_30] : memref<1x128xf32, #tpu.memory_space<vmem>>, vector<1x128xf32>
    %49 = vector.broadcast %48 : vector<1x128xf32> to vector<14x128xf32>
    %50 = arith.addf %47, %49 : vector<14x128xf32>
    %cst_31 = arith.constant 0.000000e+00 : f32
    %51 = vector.broadcast %cst_31 : f32 to vector<14x128xf32>
    %52 = arith.maximumf %50, %51 : vector<14x128xf32>
    %cst_32 = arith.constant dense<0xFF800000> : vector<128xf32>
    %53 = vector.multi_reduction <maximumf>, %52, %cst_32 [0] : vector<14x128xf32> to vector<128xf32>
    %54 = vector.shape_cast %53 : vector<128xf32> to vector<1x128xf32>
    %55 = arith.truncf %54 : vector<1x128xf32> to vector<1x128xbf16>
    %c0_33 = arith.constant 0 : index
    %c0_34 = arith.constant 0 : index
    %56 = vector.load %arg4[%c0_33, %c0_34] : memref<128x8xbf16, #tpu.memory_space<vmem>>, vector<128x8xbf16>
    %cst_35 = arith.constant dense<0.000000e+00> : vector<1x8xf32>
    %57 = tpu.matmul %55, %56, %cst_35 {dimension_numbers = #tpu.dot_dimension_numbers<[1], [0], [0], [1], [0, 0, 1, 1], [], []>} : vector<1x128xbf16>, vector<128x8xbf16>, vector<1x8xf32> -> vector<1x8xf32>
    %cst_36 = arith.constant 0.000000e+00 : f32
    %58 = vector.broadcast %cst_36 : f32 to vector<1x8xf32>
    %59 = arith.maximumf %57, %58 : vector<1x8xf32>
    %60 = arith.truncf %59 : vector<1x8xf32> to vector<1x8xbf16>
    %c0_37 = arith.constant 0 : index
    %c0_38 = arith.constant 0 : index
    %61 = vector.load %arg5[%c0_37, %c0_38] : memref<8x128xbf16, #tpu.memory_space<vmem>>, vector<8x128xbf16>
    %cst_39 = arith.constant dense<0.000000e+00> : vector<1x128xf32>
    %62 = tpu.matmul %60, %61, %cst_39 {dimension_numbers = #tpu.dot_dimension_numbers<[1], [0], [0], [1], [0, 0, 1, 1], [], []>} : vector<1x8xbf16>, vector<8x128xbf16>, vector<1x128xf32> -> vector<1x128xf32>
    %63 = arith.negf %62 : vector<1x128xf32>
    %64 = math.exp %63 : vector<1x128xf32>
    %cst_40 = arith.constant 1.000000e+00 : f32
    %65 = vector.broadcast %cst_40 : f32 to vector<1x128xf32>
    %66 = arith.addf %65, %64 : vector<1x128xf32>
    %67 = arith.divf %65, %66 : vector<1x128xf32>
    %68 = vector.broadcast %67 : vector<1x128xf32> to vector<14x128xf32>
    %69 = arith.mulf %52, %68 : vector<14x128xf32>
    %cst_41 = arith.constant 0.000000e+00 : f32
    %70 = vector.broadcast %cst_41 : f32 to vector<18x128xf32>
    %c0_42 = arith.constant 0 : index
    %c0_43 = arith.constant 0 : index
    %71 = vector.load %arg16[%c0_42, %c0_43] : memref<18x128xf32, #tpu.memory_space<vmem>>, vector<18x128xf32>
    tpu.vector_store %arg16[%c0_42, %c0_43], %70 {strides = array<i32>} : memref<18x128xf32, #tpu.memory_space<vmem>>, vector<18x128xf32>,
    %c2_44 = arith.constant 2 : index
    %c0_45 = arith.constant 0 : index
    %72 = vector.load %arg16[%c2_44, %c0_45] : memref<18x128xf32, #tpu.memory_space<vmem>>, vector<14x128xf32>
    tpu.vector_store %arg16[%c2_44, %c0_45], %69 {strides = array<i32>} : memref<18x128xf32, #tpu.memory_space<vmem>>, vector<14x128xf32>,
    %cst_46 = arith.constant 0.000000e+00 : f32
    %73 = vector.broadcast %cst_46 : f32 to vector<14x256xf32>
    %c0_47 = arith.constant 0 : index
    %c0_48 = arith.constant 0 : index
    %74 = vector.load %arg16[%c0_47, %c0_48] : memref<18x128xf32, #tpu.memory_space<vmem>>, vector<14x128xf32>
    %75 = arith.truncf %74 : vector<14x128xf32> to vector<14x128xbf16>
    %c0_49 = arith.constant 0 : index
    %c0_50 = arith.constant 0 : index
    %c0_51 = arith.constant 0 : index
    %76 = vector.load %arg6[%c0_49, %c0_50, %c0_51] : memref<5x128x256xbf16, #tpu.memory_space<vmem>>, vector<1x128x256xbf16>
    %77 = vector.shape_cast %76 : vector<1x128x256xbf16> to vector<128x256xbf16>
    %cst_52 = arith.constant dense<0.000000e+00> : vector<14x256xf32>
    %78 = tpu.matmul %75, %77, %cst_52 {dimension_numbers = #tpu.dot_dimension_numbers<[1], [0], [0], [1], [0, 0, 1, 1], [], []>} : vector<14x128xbf16>, vector<128x256xbf16>, vector<14x256xf32> -> vector<14x256xf32>
    %79 = arith.addf %73, %78 : vector<14x256xf32>
    %c1_53 = arith.constant 1 : index
    %c0_54 = arith.constant 0 : index
    %80 = vector.load %arg16[%c1_53, %c0_54] : memref<18x128xf32, #tpu.memory_space<vmem>>, vector<14x128xf32>
    %81 = arith.truncf %80 : vector<14x128xf32> to vector<14x128xbf16>
    %c1_55 = arith.constant 1 : index
    %c0_56 = arith.constant 0 : index
    %c0_57 = arith.constant 0 : index
    %82 = vector.load %arg6[%c1_55, %c0_56, %c0_57] : memref<5x128x256xbf16, #tpu.memory_space<vmem>>, vector<1x128x256xbf16>
    %83 = vector.shape_cast %82 : vector<1x128x256xbf16> to vector<128x256xbf16>
    %cst_58 = arith.constant dense<0.000000e+00> : vector<14x256xf32>
    %84 = tpu.matmul %81, %83, %cst_58 {dimension_numbers = #tpu.dot_dimension_numbers<[1], [0], [0], [1], [0, 0, 1, 1], [], []>} : vector<14x128xbf16>, vector<128x256xbf16>, vector<14x256xf32> -> vector<14x256xf32>
    %85 = arith.addf %79, %84 : vector<14x256xf32>
    %c2_59 = arith.constant 2 : index
    %c0_60 = arith.constant 0 : index
    %86 = vector.load %arg16[%c2_59, %c0_60] : memref<18x128xf32, #tpu.memory_space<vmem>>, vector<14x128xf32>
    %87 = arith.truncf %86 : vector<14x128xf32> to vector<14x128xbf16>
    %c2_61 = arith.constant 2 : index
    %c0_62 = arith.constant 0 : index
    %c0_63 = arith.constant 0 : index
    %88 = vector.load %arg6[%c2_61, %c0_62, %c0_63] : memref<5x128x256xbf16, #tpu.memory_space<vmem>>, vector<1x128x256xbf16>
    %89 = vector.shape_cast %88 : vector<1x128x256xbf16> to vector<128x256xbf16>
    %cst_64 = arith.constant dense<0.000000e+00> : vector<14x256xf32>
    %90 = tpu.matmul %87, %89, %cst_64 {dimension_numbers = #tpu.dot_dimension_numbers<[1], [0], [0], [1], [0, 0, 1, 1], [], []>} : vector<14x128xbf16>, vector<128x256xbf16>, vector<14x256xf32> -> vector<14x256xf32>
    %91 = arith.addf %85, %90 : vector<14x256xf32>
    %c3_65 = arith.constant 3 : index
    %c0_66 = arith.constant 0 : index
    %92 = vector.load %arg16[%c3_65, %c0_66] : memref<18x128xf32, #tpu.memory_space<vmem>>, vector<14x128xf32>
    %93 = arith.truncf %92 : vector<14x128xf32> to vector<14x128xbf16>
    %c3_67 = arith.constant 3 : index
    %c0_68 = arith.constant 0 : index
    %c0_69 = arith.constant 0 : index
    %94 = vector.load %arg6[%c3_67, %c0_68, %c0_69] : memref<5x128x256xbf16, #tpu.memory_space<vmem>>, vector<1x128x256xbf16>
    %95 = vector.shape_cast %94 : vector<1x128x256xbf16> to vector<128x256xbf16>
    %cst_70 = arith.constant dense<0.000000e+00> : vector<14x256xf32>
    %96 = tpu.matmul %93, %95, %cst_70 {dimension_numbers = #tpu.dot_dimension_numbers<[1], [0], [0], [1], [0, 0, 1, 1], [], []>} : vector<14x128xbf16>, vector<128x256xbf16>, vector<14x256xf32> -> vector<14x256xf32>
    %97 = arith.addf %91, %96 : vector<14x256xf32>
    %c4_71 = arith.constant 4 : index
    %c0_72 = arith.constant 0 : index
    %98 = vector.load %arg16[%c4_71, %c0_72] : memref<18x128xf32, #tpu.memory_space<vmem>>, vector<14x128xf32>
    %99 = arith.truncf %98 : vector<14x128xf32> to vector<14x128xbf16>
    %c4_73 = arith.constant 4 : index
    %c0_74 = arith.constant 0 : index
    %c0_75 = arith.constant 0 : index
    %100 = vector.load %arg6[%c4_73, %c0_74, %c0_75] : memref<5x128x256xbf16, #tpu.memory_space<vmem>>, vector<1x128x256xbf16>
    %101 = vector.shape_cast %100 : vector<1x128x256xbf16> to vector<128x256xbf16>
    %cst_76 = arith.constant dense<0.000000e+00> : vector<14x256xf32>
    %102 = tpu.matmul %99, %101, %cst_76 {dimension_numbers = #tpu.dot_dimension_numbers<[1], [0], [0], [1], [0, 0, 1, 1], [], []>} : vector<14x128xbf16>, vector<128x256xbf16>, vector<14x256xf32> -> vector<14x256xf32>
    %103 = arith.addf %97, %102 : vector<14x256xf32>
    %c0_77 = arith.constant 0 : index
    %c0_78 = arith.constant 0 : index
    %104 = vector.load %arg7[%c0_77, %c0_78] : memref<1x256xf32, #tpu.memory_space<vmem>>, vector<1x256xf32>
    %105 = vector.broadcast %104 : vector<1x256xf32> to vector<14x256xf32>
    %106 = arith.addf %103, %105 : vector<14x256xf32>
    %cst_79 = arith.constant 0.000000e+00 : f32
    %107 = vector.broadcast %cst_79 : f32 to vector<14x256xf32>
    %108 = arith.maximumf %106, %107 : vector<14x256xf32>
    %cst_80 = arith.constant dense<0xFF800000> : vector<256xf32>
    %109 = vector.multi_reduction <maximumf>, %108, %cst_80 [0] : vector<14x256xf32> to vector<256xf32>
    %110 = vector.shape_cast %109 : vector<256xf32> to vector<1x256xf32>
    %111 = arith.truncf %110 : vector<1x256xf32> to vector<1x256xbf16>
    %c0_81 = arith.constant 0 : index
    %c0_82 = arith.constant 0 : index
    %112 = vector.load %arg8[%c0_81, %c0_82] : memref<256x16xbf16, #tpu.memory_space<vmem>>, vector<256x16xbf16>
    %cst_83 = arith.constant dense<0.000000e+00> : vector<1x16xf32>
    %113 = tpu.matmul %111, %112, %cst_83 {dimension_numbers = #tpu.dot_dimension_numbers<[1], [0], [0], [1], [0, 0, 1, 1], [], []>} : vector<1x256xbf16>, vector<256x16xbf16>, vector<1x16xf32> -> vector<1x16xf32>
    %cst_84 = arith.constant 0.000000e+00 : f32
    %114 = vector.broadcast %cst_84 : f32 to vector<1x16xf32>
    %115 = arith.maximumf %113, %114 : vector<1x16xf32>
    %116 = arith.truncf %115 : vector<1x16xf32> to vector<1x16xbf16>
    %c0_85 = arith.constant 0 : index
    %c0_86 = arith.constant 0 : index
    %117 = vector.load %arg9[%c0_85, %c0_86] : memref<16x256xbf16, #tpu.memory_space<vmem>>, vector<16x256xbf16>
    %cst_87 = arith.constant dense<0.000000e+00> : vector<1x256xf32>
    %118 = tpu.matmul %116, %117, %cst_87 {dimension_numbers = #tpu.dot_dimension_numbers<[1], [0], [0], [1], [0, 0, 1, 1], [], []>} : vector<1x16xbf16>, vector<16x256xbf16>, vector<1x256xf32> -> vector<1x256xf32>
    %119 = arith.negf %118 : vector<1x256xf32>
    %120 = math.exp %119 : vector<1x256xf32>
    %cst_88 = arith.constant 1.000000e+00 : f32
    %121 = vector.broadcast %cst_88 : f32 to vector<1x256xf32>
    %122 = arith.addf %121, %120 : vector<1x256xf32>
    %123 = arith.divf %121, %122 : vector<1x256xf32>
    %124 = vector.broadcast %123 : vector<1x256xf32> to vector<14x256xf32>
    %125 = arith.mulf %108, %124 : vector<14x256xf32>
    %cst_89 = arith.constant 0.000000e+00 : f32
    %126 = vector.broadcast %cst_89 : f32 to vector<18x256xf32>
    %c0_90 = arith.constant 0 : index
    %c0_91 = arith.constant 0 : index
    %127 = vector.load %arg17[%c0_90, %c0_91] : memref<18x256xf32, #tpu.memory_space<vmem>>, vector<18x256xf32>
    tpu.vector_store %arg17[%c0_90, %c0_91], %126 {strides = array<i32>} : memref<18x256xf32, #tpu.memory_space<vmem>>, vector<18x256xf32>,
    %c2_92 = arith.constant 2 : index
    %c0_93 = arith.constant 0 : index
    %128 = vector.load %arg17[%c2_92, %c0_93] : memref<18x256xf32, #tpu.memory_space<vmem>>, vector<14x256xf32>
    tpu.vector_store %arg17[%c2_92, %c0_93], %125 {strides = array<i32>} : memref<18x256xf32, #tpu.memory_space<vmem>>, vector<14x256xf32>,
    %cst_94 = arith.constant 0.000000e+00 : f32
    %129 = vector.broadcast %cst_94 : f32 to vector<16x128xf32>
    %c0_95 = arith.constant 0 : index
    %c0_96 = arith.constant 0 : index
    %130 = vector.load %arg17[%c0_95, %c0_96] : memref<18x256xf32, #tpu.memory_space<vmem>>, vector<16x256xf32>
    %131 = arith.truncf %130 : vector<16x256xf32> to vector<16x256xbf16>
    %c0_97 = arith.constant 0 : index
    %c0_98 = arith.constant 0 : index
    %c0_99 = arith.constant 0 : index
    %132 = vector.load %arg10[%c0_97, %c0_98, %c0_99] : memref<3x256x128xbf16, #tpu.memory_space<vmem>>, vector<1x256x128xbf16>
    %133 = vector.shape_cast %132 : vector<1x256x128xbf16> to vector<256x128xbf16>
    %cst_100 = arith.constant dense<0.000000e+00> : vector<16x128xf32>
    %134 = tpu.matmul %131, %133, %cst_100 {dimension_numbers = #tpu.dot_dimension_numbers<[1], [0], [0], [1], [0, 0, 1, 1], [], []>} : vector<16x256xbf16>, vector<256x128xbf16>, vector<16x128xf32> -> vector<16x128xf32>
    %135 = arith.addf %129, %134 : vector<16x128xf32>
    %c1_101 = arith.constant 1 : index
    %c0_102 = arith.constant 0 : index
    %136 = vector.load %arg17[%c1_101, %c0_102] : memref<18x256xf32, #tpu.memory_space<vmem>>, vector<16x256xf32>
    %137 = arith.truncf %136 : vector<16x256xf32> to vector<16x256xbf16>
    %c1_103 = arith.constant 1 : index
    %c0_104 = arith.constant 0 : index
    %c0_105 = arith.constant 0 : index
    %138 = vector.load %arg10[%c1_103, %c0_104, %c0_105] : memref<3x256x128xbf16, #tpu.memory_space<vmem>>, vector<1x256x128xbf16>
    %139 = vector.shape_cast %138 : vector<1x256x128xbf16> to vector<256x128xbf16>
    %cst_106 = arith.constant dense<0.000000e+00> : vector<16x128xf32>
    %140 = tpu.matmul %137, %139, %cst_106 {dimension_numbers = #tpu.dot_dimension_numbers<[1], [0], [0], [1], [0, 0, 1, 1], [], []>} : vector<16x256xbf16>, vector<256x128xbf16>, vector<16x128xf32> -> vector<16x128xf32>
    %141 = arith.addf %135, %140 : vector<16x128xf32>
    %c2_107 = arith.constant 2 : index
    %c0_108 = arith.constant 0 : index
    %142 = vector.load %arg17[%c2_107, %c0_108] : memref<18x256xf32, #tpu.memory_space<vmem>>, vector<16x256xf32>
    %143 = arith.truncf %142 : vector<16x256xf32> to vector<16x256xbf16>
    %c2_109 = arith.constant 2 : index
    %c0_110 = arith.constant 0 : index
    %c0_111 = arith.constant 0 : index
    %144 = vector.load %arg10[%c2_109, %c0_110, %c0_111] : memref<3x256x128xbf16, #tpu.memory_space<vmem>>, vector<1x256x128xbf16>
    %145 = vector.shape_cast %144 : vector<1x256x128xbf16> to vector<256x128xbf16>
    %cst_112 = arith.constant dense<0.000000e+00> : vector<16x128xf32>
    %146 = tpu.matmul %143, %145, %cst_112 {dimension_numbers = #tpu.dot_dimension_numbers<[1], [0], [0], [1], [0, 0, 1, 1], [], []>} : vector<16x256xbf16>, vector<256x128xbf16>, vector<16x128xf32> -> vector<16x128xf32>
    %147 = arith.addf %141, %146 : vector<16x128xf32>
    %c0_113 = arith.constant 0 : index
    %c0_114 = arith.constant 0 : index
    %148 = vector.load %arg11[%c0_113, %c0_114] : memref<1x128xf32, #tpu.memory_space<vmem>>, vector<1x128xf32>
    %149 = vector.broadcast %148 : vector<1x128xf32> to vector<16x128xf32>
    %150 = arith.addf %147, %149 : vector<16x128xf32>
    %cst_115 = arith.constant 0.000000e+00 : f32
    %151 = vector.broadcast %cst_115 : f32 to vector<16x128xf32>
    %152 = arith.maximumf %150, %151 : vector<16x128xf32>
    %cst_116 = arith.constant dense<0.000000e+00> : vector<128xf32>
    %153 = vector.multi_reduction <add>, %152, %cst_116 [0] : vector<16x128xf32> to vector<128xf32>
    %154 = vector.shape_cast %153 : vector<128xf32> to vector<1x128xf32>
    %cst_117 = arith.constant 1.600000e+01 : f32
    %155 = vector.broadcast %cst_117 : f32 to vector<1x128xf32>
    %156 = arith.divf %154, %155 : vector<1x128xf32>
    %157 = arith.truncf %156 : vector<1x128xf32> to vector<1x128xbf16>
    %c0_118 = arith.constant 0 : index
    %c0_119 = arith.constant 0 : index
    %158 = vector.load %arg12[%c0_118, %c0_119] : memref<128x10xbf16, #tpu.memory_space<vmem>>, vector<128x10xbf16>
    %cst_120 = arith.constant dense<0.000000e+00> : vector<1x10xf32>
    %159 = tpu.matmul %157, %158, %cst_120 {dimension_numbers = #tpu.dot_dimension_numbers<[1], [0], [0], [1], [0, 0, 1, 1], [], []>} : vector<1x128xbf16>, vector<128x10xbf16>, vector<1x10xf32> -> vector<1x10xf32>
    %c0_121 = arith.constant 0 : index
    %c0_122 = arith.constant 0 : index
    %160 = vector.load %arg13[%c0_121, %c0_122] : memref<1x10xf32, #tpu.memory_space<vmem>>, vector<1x10xf32>
    %161 = arith.addf %159, %160 : vector<1x10xf32>
    %cst_123 = arith.constant dense<0xFF800000> : vector<1xf32>
    %162 = vector.multi_reduction <maximumf>, %161, %cst_123 [1] : vector<1x10xf32> to vector<1xf32>
    %163 = vector.shape_cast %162 : vector<1xf32> to vector<1x1xf32>
    %164 = vector.broadcast %163 : vector<1x1xf32> to vector<1x10xf32>
    %165 = arith.subf %161, %164 : vector<1x10xf32>
    %166 = math.exp %165 : vector<1x10xf32>
    %cst_124 = arith.constant dense<0.000000e+00> : vector<1xf32>
    %167 = vector.multi_reduction <add>, %166, %cst_124 [1] : vector<1x10xf32> to vector<1xf32>
    %168 = vector.shape_cast %167 : vector<1xf32> to vector<1x1xf32>
    %169 = math.log %168 : vector<1x1xf32>
    %170 = arith.addf %163, %169 : vector<1x1xf32>
    %171 = vector.broadcast %170 : vector<1x1xf32> to vector<1x10xf32>
    %172 = arith.subf %161, %171 : vector<1x10xf32>
    %c0_125 = arith.constant 0 : index
    %c0_126 = arith.constant 0 : index
    %c0_127 = arith.constant 0 : index
    %173 = vector.load %arg14[%c0_125, %c0_126, %c0_127] : memref<1x1x10xf32, #tpu.memory_space<vmem>>, vector<1x1x10xf32>
    %174 = vector.shape_cast %173 : vector<1x1x10xf32> to vector<1x10xf32>
    %175 = vector.shape_cast %172 : vector<1x10xf32> to vector<1x1x10xf32>
    tpu.vector_store %arg14[%c0_125, %c0_126, %c0_127], %175 {strides = array<i32>} : memref<1x1x10xf32, #tpu.memory_space<vmem>>, vector<1x1x10xf32>,
    return
  }
  func.func @transform_0(%arg0: i32) -> (i32, i32, i32) {
    %c0_i32 = arith.constant 0 : i32
    %c0_i32_0 = arith.constant 0 : i32
    %c0_i32_1 = arith.constant 0 : i32
    return %arg0, %c0_i32, %c0_i32_0 : i32, i32, i32
  }
  func.func @transform_1(%arg0: i32) -> (i32, i32) {
    %c0_i32 = arith.constant 0 : i32
    %c0_i32_0 = arith.constant 0 : i32
    %c0_i32_1 = arith.constant 0 : i32
    return %c0_i32, %c0_i32_0 : i32, i32
  }
  func.func @transform_2(%arg0: i32) -> (i32, i32) {
    %c0_i32 = arith.constant 0 : i32
    %c0_i32_0 = arith.constant 0 : i32
    %c0_i32_1 = arith.constant 0 : i32
    return %c0_i32, %c0_i32_0 : i32, i32
  }
  func.func @transform_3(%arg0: i32) -> (i32, i32) {
    %c0_i32 = arith.constant 0 : i32
    %c0_i32_0 = arith.constant 0 : i32
    %c0_i32_1 = arith.constant 0 : i32
    return %c0_i32, %c0_i32_0 : i32, i32
  }
  func.func @transform_4(%arg0: i32) -> (i32, i32) {
    %c0_i32 = arith.constant 0 : i32
    %c0_i32_0 = arith.constant 0 : i32
    %c0_i32_1 = arith.constant 0 : i32
    return %c0_i32, %c0_i32_0 : i32, i32
  }
  func.func @transform_5(%arg0: i32) -> (i32, i32, i32) {
    %c0_i32 = arith.constant 0 : i32
    %c0_i32_0 = arith.constant 0 : i32
    %c0_i32_1 = arith.constant 0 : i32
    %c0_i32_2 = arith.constant 0 : i32
    return %c0_i32, %c0_i32_0, %c0_i32_1 : i32, i32, i32
  }
  func.func @transform_6(%arg0: i32) -> (i32, i32) {
    %c0_i32 = arith.constant 0 : i32
    %c0_i32_0 = arith.constant 0 : i32
    %c0_i32_1 = arith.constant 0 : i32
    return %c0_i32, %c0_i32_0 : i32, i32
  }
  func.func @transform_7(%arg0: i32) -> (i32, i32) {
    %c0_i32 = arith.constant 0 : i32
    %c0_i32_0 = arith.constant 0 : i32
    %c0_i32_1 = arith.constant 0 : i32
    return %c0_i32, %c0_i32_0 : i32, i32
  }
  func.func @transform_8(%arg0: i32) -> (i32, i32) {
    %c0_i32 = arith.constant 0 : i32
    %c0_i32_0 = arith.constant 0 : i32
    %c0_i32_1 = arith.constant 0 : i32
    return %c0_i32, %c0_i32_0 : i32, i32
  }
  func.func @transform_9(%arg0: i32) -> (i32, i32, i32) {
    %c0_i32 = arith.constant 0 : i32
    %c0_i32_0 = arith.constant 0 : i32
    %c0_i32_1 = arith.constant 0 : i32
    %c0_i32_2 = arith.constant 0 : i32
    return %c0_i32, %c0_i32_0, %c0_i32_1 : i32, i32, i32
  }
  func.func @transform_10(%arg0: i32) -> (i32, i32) {
    %c0_i32 = arith.constant 0 : i32
    %c0_i32_0 = arith.constant 0 : i32
    %c0_i32_1 = arith.constant 0 : i32
    return %c0_i32, %c0_i32_0 : i32, i32
  }
  func.func @transform_11(%arg0: i32) -> (i32, i32) {
    %c0_i32 = arith.constant 0 : i32
    %c0_i32_0 = arith.constant 0 : i32
    %c0_i32_1 = arith.constant 0 : i32
    return %c0_i32, %c0_i32_0 : i32, i32
  }
  func.func @transform_12(%arg0: i32) -> (i32, i32) {
    %c0_i32 = arith.constant 0 : i32
    %c0_i32_0 = arith.constant 0 : i32
    %c0_i32_1 = arith.constant 0 : i32
    return %c0_i32, %c0_i32_0 : i32, i32
  }
  func.func @transform_13(%arg0: i32) -> (i32, i32, i32) {
    %c0_i32 = arith.constant 0 : i32
    %c0_i32_0 = arith.constant 0 : i32
    %c0_i32_1 = arith.constant 0 : i32
    return %arg0, %c0_i32, %c0_i32_0 : i32, i32, i32
  }
}

</mosaic_0001>

<llo_original>
// kernel: mlstm_forward.1
$region0: #{mlstm_forward.1}
  #allocation0 [shape = 'u32[]', space=smem, size = 0x4, offset = 0x4, fixed_abs, tag = 'smem constant byte address 0x4 - core index']
  #allocation1 [shape = 'u32[144,128]{1,0:T(1,128)}', space=vmem, size = 0x12000, scoped, tag = 'internal scratch']
  #allocation2 [shape = 'f32[20,1]{1,0:T(8,128)}', space=vmem, size = 0x3000, scoped, tag = 'scratch operand']
  #allocation3 [shape = 'f32[18,128]{1,0:T(8,128)}', space=vmem, size = 0x3000, scoped, tag = 'scratch operand']
  #allocation4 [shape = 'f32[18,256]{1,0:T(8,128)}', space=vmem, size = 0x6000, scoped, tag = 'scratch operand']
  %s0 = inlined_call_operand.vmem [shape: f32[2,16,1], index: 0, kind: input, shape index: {}]
  %s1 = inlined_call_operand.vmem [shape: f32[7,128], index: 1, kind: input, shape index: {}]
  %s2 = inlined_call_operand.vmem [shape: f32[1,128], index: 2, kind: input, shape index: {}]
  %s3 = inlined_call_operand.vmem [shape: bf16[128,8], index: 3, kind: input, shape index: {}]
  %s4 = inlined_call_operand.vmem [shape: bf16[8,128], index: 4, kind: input, shape index: {}]
  %s5 = inlined_call_operand.hbm [shape: bf16[5,128,256], index: 5, kind: input, shape index: {}]
  %s6 = inlined_call_operand.vmem [shape: f32[1,256], index: 6, kind: input, shape index: {}]
  %s7 = inlined_call_operand.vmem [shape: bf16[256,16], index: 7, kind: input, shape index: {}]
  %s8 = inlined_call_operand.vmem [shape: bf16[16,256], index: 8, kind: input, shape index: {}]
  %s9 = inlined_call_operand.hbm [shape: bf16[3,256,128], index: 9, kind: input, shape index: {}]
  %s10 = inlined_call_operand.vmem [shape: f32[1,128], index: 10, kind: input, shape index: {}]
  %s11 = inlined_call_operand.vmem [shape: bf16[128,10], index: 11, kind: input, shape index: {}]
  %s12 = inlined_call_operand.vmem [shape: f32[1,10], index: 12, kind: input, shape index: {}]
  %s13 = inlined_call_operand.hbm [shape: f32[2,1,10], index: 13, kind: output, shape index: {}]
  %s14 = sld [smem:[#allocation0]]
  $region93: #{mlstm_forward.1} parent=0
    _
  %s16 = ssub.s32 1, %s14
  %s17 = scalar_select 0, %s16, %s14
  $region1: #{mlstm_forward.1} parent=0
    #allocation5 [shape = 'u8[327680]{0}', space=vmem, size = 0x50000, scoped, tag = 'input window, operand 5, single buffered']
    #allocation6 [shape = 's32[2]{0}', space=sflag, size = 0x8, scoped, tag = 'scoped memory for mlstm_forward.1']
    #allocation7 [shape = 's32[2]{0}', space=sflag, size = 0x8, scoped, tag = 'scoped memory for mlstm_forward.1']
    #allocation8 [shape = 'u8[196608]{0}', space=vmem, size = 0x30000, scoped, tag = 'input window, operand 9, single buffered']
    #allocation9 [shape = 's32[1]{0}', space=sflag, size = 0x4, scoped, tag = 'scoped memory for mlstm_forward.1']
    #allocation10 [shape = 'u8[1024]{0}', space=vmem, size = 0x400, scoped, tag = 'output window, operand 0']
    %18 = vsyncpa [#allocation6], 0
    %19 = vsyncpa [#allocation9], 0
    %20 = vsyncpa [#allocation7], 0
    %s21 = scalar_lea.sflag [#allocation7], 1
    %22 = vsyncpa %s21, 0
    loop: start=0, step=1, limit=4
    $region2: #{mlstm_forward.1} parent=1 // loop_pre_header
      _
    $region3: #{mlstm_forward.1} parent=1 // loop_header
      %s24 = sphi 0, %s28
      %p25 = scmp.ge.s32.totalorder %s24, 4
      %s34 = sphi 0, %s36
      %s37 = sphi 0, %s34
      %s38 = sphi 0, %s37
      %s54 = sphi 0, %s38
      %s58 = sphi 0, %s58
      %s60 = sphi 0, %s58
      %s61 = sphi 0, %s60
      %s75 = sphi 0, %s61
      %s79 = sphi 0, %s79
      %s81 = sphi 0, %s79
      %s82 = sphi 0, %s81
      %s96 = sphi 0, %s82
      %s100 = sphi 0, %s100
      %s102 = sphi 0, %s100
      %s103 = sphi 0, %s102
      %s117 = sphi 0, %s103
      %s121 = sphi 0, %s121
      %s123 = sphi 0, %s121
      %s124 = sphi 0, %s123
      %s138 = sphi 0, %s124
      %s142 = sphi 0, %s142
      %s144 = sphi 0, %s142
      %s145 = sphi 0, %s144
      %s159 = sphi 0, %s145
      %s163 = sphi 0, %s163
      %s165 = sphi 0, %s163
      %s166 = sphi 0, %s165
      %s180 = sphi 0, %s166
      %s184 = sphi 0, %s184
      %s186 = sphi 0, %s184
      %s187 = sphi 0, %s186
      %s201 = sphi 0, %s187
      %s205 = sphi 0, %s205
      %s207 = sphi 0, %s205
      %s208 = sphi 0, %s207
      %s222 = sphi 0, %s208
      %s226 = sphi 0, %s226
      %s228 = sphi 0, %s226
      %s229 = sphi 0, %s228
      %s243 = sphi 0, %s229
      %s247 = sphi 0, %s247
      %s249 = sphi 0, %s247
      %s250 = sphi 0, %s249
      %s264 = sphi 0, %s250
      %s268 = sphi 0, %s268
      %s270 = sphi 0, %s268
      %s271 = sphi 0, %s270
      %s285 = sphi 0, %s271
      %s289 = sphi 0, %s289
      %s291 = sphi 0, %s289
      %s292 = sphi 0, %s291
      %s306 = sphi 0, %s292
      %s312 = sphi 0, %s314
      %s315 = sphi 0, %s312
      %s316 = sphi 0, %s315
      %s332 = sphi 0, %s316
    $region4: #{mlstm_forward.1} parent=1 // loop_header_branch
      %27 = sbr.rel (%p25) target = $region8
    $region5: #{mlstm_forward.1} parent=1 // loop_body
      %s29 = ssub.s32 %s24, 1
      %s30 = ssub.s32 %s24, 2
      %s31 = sadd.s32 %s24, 1
      %s32 = ssub.s32 %s24, %s31
      %p33 = scmp.eq.s32.totalorder %s32, 0
      %s35 = sadd.s32 %s34, 1
      %s36 = scalar_select %p33, %s34, %s35
      %p39 = pneg %p33
      %p40 = scmp.eq.s32.totalorder %s24, 1
      %p41 = por %p39, %p40
      %p42 = scmp.ne.s32.totalorder %s34, %s37
      %p43 = scmp.eq.s32.totalorder %s24, 0
      %p44 = por %p42, %p43
      %p45 = scmp.ne.s32.totalorder %s34, %s37
      %p46 = scmp.eq.s32.totalorder %s29, 1
      %p47 = por %p45, %p46
      %p48 = scmp.ne.s32.totalorder %s37, %s38
      %p49 = scmp.eq.s32.totalorder %s29, 0
      %p50 = por %p48, %p49
      %p51 = scmp.ne.s32.totalorder %s37, %s38
      %p52 = scmp.eq.s32.totalorder %s30, 1
      %p53 = por %p51, %p52
      %p55 = scmp.ne.s32.totalorder %s38, %s54
      %p56 = scmp.eq.s32.totalorder %s30, 0
      %p57 = por %p55, %p56
      %s59 = sadd.s32 %s58, 1
      %p62 = scmp.eq.s32.totalorder %s24, 1
      %p63 = scmp.ne.s32.totalorder %s58, %s60
      %p64 = scmp.eq.s32.totalorder %s24, 0
      %p65 = por %p63, %p64
      %p66 = scmp.ne.s32.totalorder %s58, %s60
      %p67 = scmp.eq.s32.totalorder %s29, 1
      %p68 = por %p66, %p67
      %p69 = scmp.ne.s32.totalorder %s60, %s61
      %p70 = scmp.eq.s32.totalorder %s29, 0
      %p71 = por %p69, %p70
      %p72 = scmp.ne.s32.totalorder %s60, %s61
      %p73 = scmp.eq.s32.totalorder %s30, 1
      %p74 = por %p72, %p73
      %p76 = scmp.ne.s32.totalorder %s61, %s75
      %p77 = scmp.eq.s32.totalorder %s30, 0
      %p78 = por %p76, %p77
      %s80 = sadd.s32 %s79, 1
      %p83 = scmp.eq.s32.totalorder %s24, 1
      %p84 = scmp.ne.s32.totalorder %s79, %s81
      %p85 = scmp.eq.s32.totalorder %s24, 0
      %p86 = por %p84, %p85
      %p87 = scmp.ne.s32.totalorder %s79, %s81
      %p88 = scmp.eq.s32.totalorder %s29, 1
      %p89 = por %p87, %p88
      %p90 = scmp.ne.s32.totalorder %s81, %s82
      %p91 = scmp.eq.s32.totalorder %s29, 0
      %p92 = por %p90, %p91
      %p93 = scmp.ne.s32.totalorder %s81, %s82
      %p94 = scmp.eq.s32.totalorder %s30, 1
      %p95 = por %p93, %p94
      %p97 = scmp.ne.s32.totalorder %s82, %s96
      %p98 = scmp.eq.s32.totalorder %s30, 0
      %p99 = por %p97, %p98
      %s101 = sadd.s32 %s100, 1
      %p104 = scmp.eq.s32.totalorder %s24, 1
      %p105 = scmp.ne.s32.totalorder %s100, %s102
      %p106 = scmp.eq.s32.totalorder %s24, 0
      %p107 = por %p105, %p106
      %p108 = scmp.ne.s32.totalorder %s100, %s102
      %p109 = scmp.eq.s32.totalorder %s29, 1
      %p110 = por %p108, %p109
      %p111 = scmp.ne.s32.totalorder %s102, %s103
      %p112 = scmp.eq.s32.totalorder %s29, 0
      %p113 = por %p111, %p112
      %p114 = scmp.ne.s32.totalorder %s102, %s103
      %p115 = scmp.eq.s32.totalorder %s30, 1
      %p116 = por %p114, %p115
      %p118 = scmp.ne.s32.totalorder %s103, %s117
      %p119 = scmp.eq.s32.totalorder %s30, 0
      %p120 = por %p118, %p119
      %s122 = sadd.s32 %s121, 1
      %p125 = scmp.eq.s32.totalorder %s24, 1
      %p126 = scmp.ne.s32.totalorder %s121, %s123
      %p127 = scmp.eq.s32.totalorder %s24, 0
      %p128 = por %p126, %p127
      %p129 = scmp.ne.s32.totalorder %s121, %s123
      %p130 = scmp.eq.s32.totalorder %s29, 1
      %p131 = por %p129, %p130
      %p132 = scmp.ne.s32.totalorder %s123, %s124
      %p133 = scmp.eq.s32.totalorder %s29, 0
      %p134 = por %p132, %p133
      %p135 = scmp.ne.s32.totalorder %s123, %s124
      %p136 = scmp.eq.s32.totalorder %s30, 1
      %p137 = por %p135, %p136
      %p139 = scmp.ne.s32.totalorder %s124, %s138
      %p140 = scmp.eq.s32.totalorder %s30, 0
      %p141 = por %p139, %p140
      %s143 = sadd.s32 %s142, 1
      %p146 = scmp.eq.s32.totalorder %s24, 1
      %p147 = scmp.ne.s32.totalorder %s142, %s144
      %p148 = scmp.eq.s32.totalorder %s24, 0
      %p149 = por %p147, %p148
      %p150 = scmp.ne.s32.totalorder %s142, %s144
      %p151 = scmp.eq.s32.totalorder %s29, 1
      %p152 = por %p150, %p151
      %p153 = scmp.ne.s32.totalorder %s144, %s145
      %p154 = scmp.eq.s32.totalorder %s29, 0
      %p155 = por %p153, %p154
      %p156 = scmp.ne.s32.totalorder %s144, %s145
      %p157 = scmp.eq.s32.totalorder %s30, 1
      %p158 = por %p156, %p157
      %p160 = scmp.ne.s32.totalorder %s145, %s159
      %p161 = scmp.eq.s32.totalorder %s30, 0
      %p162 = por %p160, %p161
      %s164 = sadd.s32 %s163, 1
      %p167 = scmp.eq.s32.totalorder %s24, 1
      %p168 = scmp.ne.s32.totalorder %s163, %s165
      %p169 = scmp.eq.s32.totalorder %s24, 0
      %p170 = por %p168, %p169
      %p171 = scmp.ne.s32.totalorder %s163, %s165
      %p172 = scmp.eq.s32.totalorder %s29, 1
      %p173 = por %p171, %p172
      %p174 = scmp.ne.s32.totalorder %s165, %s166
      %p175 = scmp.eq.s32.totalorder %s29, 0
      %p176 = por %p174, %p175
      %p177 = scmp.ne.s32.totalorder %s165, %s166
      %p178 = scmp.eq.s32.totalorder %s30, 1
      %p179 = por %p177, %p178
      %p181 = scmp.ne.s32.totalorder %s166, %s180
      %p182 = scmp.eq.s32.totalorder %s30, 0
      %p183 = por %p181, %p182
      %s185 = sadd.s32 %s184, 1
      %p188 = scmp.eq.s32.totalorder %s24, 1
      %p189 = scmp.ne.s32.totalorder %s184, %s186
      %p190 = scmp.eq.s32.totalorder %s24, 0
      %p191 = por %p189, %p190
      %p192 = scmp.ne.s32.totalorder %s184, %s186
      %p193 = scmp.eq.s32.totalorder %s29, 1
      %p194 = por %p192, %p193
      %p195 = scmp.ne.s32.totalorder %s186, %s187
      %p196 = scmp.eq.s32.totalorder %s29, 0
      %p197 = por %p195, %p196
      %p198 = scmp.ne.s32.totalorder %s186, %s187
      %p199 = scmp.eq.s32.totalorder %s30, 1
      %p200 = por %p198, %p199
      %p202 = scmp.ne.s32.totalorder %s187, %s201
      %p203 = scmp.eq.s32.totalorder %s30, 0
      %p204 = por %p202, %p203
      %s206 = sadd.s32 %s205, 1
      %p209 = scmp.eq.s32.totalorder %s24, 1
      %p210 = scmp.ne.s32.totalorder %s205, %s207
      %p211 = scmp.eq.s32.totalorder %s24, 0
      %p212 = por %p210, %p211
      %p213 = scmp.ne.s32.totalorder %s205, %s207
      %p214 = scmp.eq.s32.totalorder %s29, 1
      %p215 = por %p213, %p214
      %p216 = scmp.ne.s32.totalorder %s207, %s208
      %p217 = scmp.eq.s32.totalorder %s29, 0
      %p218 = por %p216, %p217
      %p219 = scmp.ne.s32.totalorder %s207, %s208
      %p220 = scmp.eq.s32.totalorder %s30, 1
      %p221 = por %p219, %p220
      %p223 = scmp.ne.s32.totalorder %s208, %s222
      %p224 = scmp.eq.s32.totalorder %s30, 0
      %p225 = por %p223, %p224
      %s227 = sadd.s32 %s226, 1
      %p230 = scmp.eq.s32.totalorder %s24, 1
      %p231 = scmp.ne.s32.totalorder %s226, %s228
      %p232 = scmp.eq.s32.totalorder %s24, 0
      %p233 = por %p231, %p232
      %p234 = scmp.ne.s32.totalorder %s226, %s228
      %p235 = scmp.eq.s32.totalorder %s29, 1
      %p236 = por %p234, %p235
      %p237 = scmp.ne.s32.totalorder %s228, %s229
      %p238 = scmp.eq.s32.totalorder %s29, 0
      %p239 = por %p237, %p238
      %p240 = scmp.ne.s32.totalorder %s228, %s229
      %p241 = scmp.eq.s32.totalorder %s30, 1
      %p242 = por %p240, %p241
      %p244 = scmp.ne.s32.totalorder %s229, %s243
      %p245 = scmp.eq.s32.totalorder %s30, 0
      %p246 = por %p244, %p245
      %s248 = sadd.s32 %s247, 1
      %p251 = scmp.eq.s32.totalorder %s24, 1
      %p252 = scmp.ne.s32.totalorder %s247, %s249
      %p253 = scmp.eq.s32.totalorder %s24, 0
      %p254 = por %p252, %p253
      %p255 = scmp.ne.s32.totalorder %s247, %s249
      %p256 = scmp.eq.s32.totalorder %s29, 1
      %p257 = por %p255, %p256
      %p258 = scmp.ne.s32.totalorder %s249, %s250
      %p259 = scmp.eq.s32.totalorder %s29, 0
      %p260 = por %p258, %p259
      %p261 = scmp.ne.s32.totalorder %s249, %s250
      %p262 = scmp.eq.s32.totalorder %s30, 1
      %p263 = por %p261, %p262
      %p265 = scmp.ne.s32.totalorder %s250, %s264
      %p266 = scmp.eq.s32.totalorder %s30, 0
      %p267 = por %p265, %p266
      %s269 = sadd.s32 %s268, 1
      %p272 = scmp.eq.s32.totalorder %s24, 1
      %p273 = scmp.ne.s32.totalorder %s268, %s270
      %p274 = scmp.eq.s32.totalorder %s24, 0
      %p275 = por %p273, %p274
      %p276 = scmp.ne.s32.totalorder %s268, %s270
      %p277 = scmp.eq.s32.totalorder %s29, 1
      %p278 = por %p276, %p277
      %p279 = scmp.ne.s32.totalorder %s270, %s271
      %p280 = scmp.eq.s32.totalorder %s29, 0
      %p281 = por %p279, %p280
      %p282 = scmp.ne.s32.totalorder %s270, %s271
      %p283 = scmp.eq.s32.totalorder %s30, 1
      %p284 = por %p282, %p283
      %p286 = scmp.ne.s32.totalorder %s271, %s285
      %p287 = scmp.eq.s32.totalorder %s30, 0
      %p288 = por %p286, %p287
      %s290 = sadd.s32 %s289, 1
      %p293 = scmp.eq.s32.totalorder %s24, 1
      %p294 = scmp.ne.s32.totalorder %s289, %s291
      %p295 = scmp.eq.s32.totalorder %s24, 0
      %p296 = por %p294, %p295
      %p297 = scmp.ne.s32.totalorder %s289, %s291
      %p298 = scmp.eq.s32.totalorder %s29, 1
      %p299 = por %p297, %p298
      %p300 = scmp.ne.s32.totalorder %s291, %s292
      %p301 = scmp.eq.s32.totalorder %s29, 0
      %p302 = por %p300, %p301
      %p303 = scmp.ne.s32.totalorder %s291, %s292
      %p304 = scmp.eq.s32.totalorder %s30, 1
      %p305 = por %p303, %p304
      %p307 = scmp.ne.s32.totalorder %s292, %s306
      %p308 = scmp.eq.s32.totalorder %s30, 0
      %p309 = por %p307, %p308
      %s310 = ssub.s32 %s24, %s31
      %p311 = scmp.eq.s32.totalorder %s310, 0
      %s313 = sadd.s32 %s312, 1
      %s314 = scalar_select %p311, %s312, %s313
      %p317 = pneg %p311
      %p318 = scmp.eq.s32.totalorder %s24, 1
      %p319 = por %p317, %p318
      %p320 = scmp.ne.s32.totalorder %s312, %s315
      %p321 = scmp.eq.s32.totalorder %s24, 0
      %p322 = por %p320, %p321
      %p323 = scmp.ne.s32.totalorder %s312, %s315
      %p324 = scmp.eq.s32.totalorder %s29, 1
      %p325 = por %p323, %p324
      %p326 = scmp.ne.s32.totalorder %s315, %s316
      %p327 = scmp.eq.s32.totalorder %s29, 0
      %p328 = por %p326, %p327
      %p329 = scmp.ne.s32.totalorder %s315, %s316
      %p330 = scmp.eq.s32.totalorder %s30, 1
      %p331 = por %p329, %p330
      %p333 = scmp.ne.s32.totalorder %s316, %s332
      %p334 = scmp.eq.s32.totalorder %s30, 0
      %p335 = por %p333, %p334
      %p336 = scmp.le.s32.totalorder 1, %s24
      %p337 = scmp.lt.s32.totalorder %s24, 3
      %p338 = pnand %p336, %p337
      %p339 = pneg %p338
      // Predicated region
      $region9: #{mlstm_forward.1} parent=5 // pred_check
        _
      $region10: #{mlstm_forward.1} parent=5 // pred_check_branch
        %341 = sbr.rel (%p338) target = $region12
      $region11: #{mlstm_forward.1} parent=5 // pred_region
        %s342 = ssub.s32 %s24, 1
        // Predicated region
        $region13: #{mlstm_forward.1} parent=11 // pred_check
          %p343 = pneg %p71
        $region14: #{mlstm_forward.1} parent=11 // pred_check_branch
          %345 = sbr.rel (%p343) target = $region16
        $region15: #{mlstm_forward.1} parent=11 // pred_region
          _
        $region16: #{mlstm_forward.1} parent=11 // pred_fallthru
          _
        // Predicated region
        $region17: #{mlstm_forward.1} parent=11 // pred_check
          %p346 = pneg %p92
        $region18: #{mlstm_forward.1} parent=11 // pred_check_branch
          %348 = sbr.rel (%p346) target = $region20
        $region19: #{mlstm_forward.1} parent=11 // pred_region
          _
        $region20: #{mlstm_forward.1} parent=11 // pred_fallthru
          _
        // Predicated region
        $region21: #{mlstm_forward.1} parent=11 // pred_check
          %p349 = pneg %p113
        $region22: #{mlstm_forward.1} parent=11 // pred_check_branch
          %351 = sbr.rel (%p349) target = $region24
        $region23: #{mlstm_forward.1} parent=11 // pred_region
          _
        $region24: #{mlstm_forward.1} parent=11 // pred_fallthru
          _
        // Predicated region
        $region25: #{mlstm_forward.1} parent=11 // pred_check
          %p352 = pneg %p134
        $region26: #{mlstm_forward.1} parent=11 // pred_check_branch
          %354 = sbr.rel (%p352) target = $region28
        $region27: #{mlstm_forward.1} parent=11 // pred_region
          _
        $region28: #{mlstm_forward.1} parent=11 // pred_fallthru
          _
        // Predicated region
        $region29: #{mlstm_forward.1} parent=11 // pred_check
          %p355 = pneg %p155
        $region30: #{mlstm_forward.1} parent=11 // pred_check_branch
          %357 = sbr.rel (%p355) target = $region32
        $region31: #{mlstm_forward.1} parent=11 // pred_region
          %s359 = ssub.s32 10240, 10240
          %360 = vsyncadd [#allocation6], %s359
          %s361 = sshll.u32 [#allocation5], 4
          %s362 = int_to_ptr.vmem [resolvable:$true] %s361
          %367 = dma.hbm_to_vmem [thread:$0]  %s5, 10240, %s362, [#allocation6], 128, 128, 8
        $region32: #{mlstm_forward.1} parent=11 // pred_fallthru
          _
        // Predicated region
        $region33: #{mlstm_forward.1} parent=11 // pred_check
          %p368 = pneg %p176
        $region34: #{mlstm_forward.1} parent=11 // pred_check_branch
          %370 = sbr.rel (%p368) target = $region36
        $region35: #{mlstm_forward.1} parent=11 // pred_region
          _
        $region36: #{mlstm_forward.1} parent=11 // pred_fallthru
          _
        // Predicated region
        $region37: #{mlstm_forward.1} parent=11 // pred_check
          %p371 = pneg %p197
        $region38: #{mlstm_forward.1} parent=11 // pred_check_branch
          %373 = sbr.rel (%p371) target = $region40
        $region39: #{mlstm_forward.1} parent=11 // pred_region
          _
        $region40: #{mlstm_forward.1} parent=11 // pred_fallthru
          _
        // Predicated region
        $region41: #{mlstm_forward.1} parent=11 // pred_check
          %p374 = pneg %p218
        $region42: #{mlstm_forward.1} parent=11 // pred_check_branch
          %376 = sbr.rel (%p374) target = $region44
        $region43: #{mlstm_forward.1} parent=11 // pred_region
          _
        $region44: #{mlstm_forward.1} parent=11 // pred_fallthru
          _
        // Predicated region
        $region45: #{mlstm_forward.1} parent=11 // pred_check
          %p377 = pneg %p239
        $region46: #{mlstm_forward.1} parent=11 // pred_check_branch
          %379 = sbr.rel (%p377) target = $region48
        $region47: #{mlstm_forward.1} parent=11 // pred_region
          %s381 = ssub.s32 6144, 6144
          %382 = vsyncadd [#allocation9], %s381
          %s383 = sshll.u32 [#allocation8], 4
          %s384 = int_to_ptr.vmem [resolvable:$true] %s383
          %389 = dma.hbm_to_vmem [thread:$0]  %s9, 6144, %s384, [#allocation9], 64, 64, 4
        $region48: #{mlstm_forward.1} parent=11 // pred_fallthru
          _
        // Predicated region
        $region49: #{mlstm_forward.1} parent=11 // pred_check
          %p390 = pneg %p260
        $region50: #{mlstm_forward.1} parent=11 // pred_check_branch
          %392 = sbr.rel (%p390) target = $region52
        $region51: #{mlstm_forward.1} parent=11 // pred_region
          _
        $region52: #{mlstm_forward.1} parent=11 // pred_fallthru
          _
        // Predicated region
        $region53: #{mlstm_forward.1} parent=11 // pred_check
          %p393 = pneg %p281
        $region54: #{mlstm_forward.1} parent=11 // pred_check_branch
          %395 = sbr.rel (%p393) target = $region56
        $region55: #{mlstm_forward.1} parent=11 // pred_region
          _
        $region56: #{mlstm_forward.1} parent=11 // pred_fallthru
          _
        // Predicated region
        $region57: #{mlstm_forward.1} parent=11 // pred_check
          %p396 = pneg %p302
        $region58: #{mlstm_forward.1} parent=11 // pred_check_branch
          %398 = sbr.rel (%p396) target = $region60
        $region59: #{mlstm_forward.1} parent=11 // pred_region
          _
        $region60: #{mlstm_forward.1} parent=11 // pred_fallthru
          _
      $region12: #{mlstm_forward.1} parent=5 // pred_fallthru
        _
      %p399 = scmp.lt.s32.totalorder %s24, 2
      // Predicated region
      $region61: #{mlstm_forward.1} parent=5 // pred_check
        %p400 = pneg %p399
      $region62: #{mlstm_forward.1} parent=5 // pred_check_branch
        %402 = sbr.rel (%p400) target = $region64
      $region63: #{mlstm_forward.1} parent=5 // pred_region
        // Predicated region
        $region65: #{mlstm_forward.1} parent=63 // pred_check
          %p403 = pneg %p44
        $region66: #{mlstm_forward.1} parent=63 // pred_check_branch
          %405 = sbr.rel (%p403) target = $region68
        $region67: #{mlstm_forward.1} parent=63 // pred_region
          %p406 = scmp.lt.s32.totalorder %s24, 1
          %s407 = scalar_select %p406, %s24, 1
          %s408 = smul.addr %s407, 2
          %s409 = smul.addr %s408, 8
          %s410 = scalar_lea.vmem %s0, %s409
        $region68: #{mlstm_forward.1} parent=63 // pred_fallthru
          _
      $region64: #{mlstm_forward.1} parent=5 // pred_fallthru
        _
      %p411 = scmp.le.s32.totalorder 1, %s24
      %p412 = scmp.lt.s32.totalorder %s24, 3
      %p413 = pnand %p411, %p412
      %p414 = pneg %p413
      // Predicated region
      $region69: #{mlstm_forward.1} parent=5 // pred_check
        _
      $region70: #{mlstm_forward.1} parent=5 // pred_check_branch
        %416 = sbr.rel (%p413) target = $region72
      $region71: #{mlstm_forward.1} parent=5 // pred_region
        %s417 = ssub.s32 %s24, 1
        // Predicated region
        $region73: #{mlstm_forward.1} parent=71 // pred_check
          %p418 = pneg %p155
        $region74: #{mlstm_forward.1} parent=71 // pred_check_branch
          %420 = sbr.rel (%p418) target = $region76
        $region75: #{mlstm_forward.1} parent=71 // pred_region
          %421 = dma.done [#allocation6], 10240
        $region76: #{mlstm_forward.1} parent=71 // pred_fallthru
          _
        // Predicated region
        $region77: #{mlstm_forward.1} parent=71 // pred_check
          %p422 = pneg %p239
        $region78: #{mlstm_forward.1} parent=71 // pred_check_branch
          %424 = sbr.rel (%p422) target = $region80
        $region79: #{mlstm_forward.1} parent=71 // pred_region
          %425 = dma.done [#allocation9], 6144
        $region80: #{mlstm_forward.1} parent=71 // pred_fallthru
          _
        %p426 = scmp.lt.s32.totalorder %s29, 1
        %s427 = scalar_select %p426, %s29, 1
        %s428 = smul.addr %s427, 2
        %s429 = smul.addr %s428, 8
        %s430 = scalar_lea.vmem %s0, %s429
        %p431 = pneg %p50
        %p432 = pneg %p47
        %p433 = pneg %p71
        %p434 = pneg %p68
        %p435 = pneg %p92
        %p436 = pneg %p89
        %p437 = pneg %p113
        %p438 = pneg %p110
        %p439 = pneg %p134
        %p440 = pneg %p131
        %p441 = pneg %p155
        %p442 = pneg %p152
        %p443 = pneg %p176
        %p444 = pneg %p173
        %p445 = pneg %p197
        %p446 = pneg %p194
        %p447 = pneg %p218
        %p448 = pneg %p215
        %p449 = pneg %p239
        %p450 = pneg %p236
        %p451 = pneg %p260
        %p452 = pneg %p257
        %p453 = pneg %p281
        %p454 = pneg %p278
        %p455 = pneg %p302
        %p456 = pneg %p299
        %p457 = pneg %p328
        %p458 = pneg %p325
        %s459 = sand.u32 %s315, 1
        %s460 = scalar_lea.sflag [#allocation7], %s459
        %s461 = sand.u32 %s315, 1
        %s462 = scalar_lea.vmem [#allocation10], %s461
        %p463 = scmp.lt.s32.totalorder %s29, 1
        %s464 = scalar_select %p463, %s29, 1
        %s465 = smul.addr %s464, 2
        %s466 = smul.addr %s465, 8
        %s467 = scalar_lea.vmem %s0, %s466
        %vm469 = vcmask 7168
        %470 = vst.msk [vmem:[#allocation2] sm:$0xff] %vm469, 0.0
        %471 = vst.msk [vmem:[#allocation2 + $0x8] sm:$0xff] %vm469, 0.0
        %vm472 = vcmask 3072
        %473 = vst.msk [vmem:[#allocation2 + $0x10] sm:$0xf] %vm472, 0.0
        %v474 = vld [vmem:[%s467] sm:$0xff]
        %v475 = vld [vmem:[%s467 + $0x8] sm:$0xff]
        %476 = vst.msk [vmem:[#allocation2 + $0x2] sm:$0xff] %vm469, %v474
        %477 = vst.msk [vmem:[#allocation2 + $0xa] sm:$0xff] %vm469, %v475
        %v478 = vld [vmem:[#allocation2] sm:$0xff]
        %v479 = vld [vmem:[#allocation2 + $0x8] sm:$0x3f]
        %v480 = vld [vmem:[%s1] sm:$0x1]
        %482 = vset.pattern.permute.xlu0 0
        %483 = vperm.xlu0 %482, %v478
        %v484 = vpop.permute.xlu0 %483
        %487 = vset.pattern.permute.xlu0 0
        %488 = vperm.xlu0 %487, %v479
        %v489 = vpop.permute.xlu0 %488
        %v491 = vlaneseq
        %v492 = vshrl.u32 %v491, 7
        %v493 = vsub.s32 0, %v492
        %v494 = vrot.slane %v480, %v493
        %v495 = vmul.f32 %v484, %v494
        %v496 = vmul.f32 %v489, %v494
        %v497 = vadd.f32 %v495, 0.0
        %v498 = vadd.f32 %v496, 0.0
        %v499 = vld [vmem:[#allocation2 + $0x1] sm:$0xff]
        %v500 = vld [vmem:[#allocation2 + $0x9] sm:$0x3f]
        %v501 = vld [vmem:[%s1 + $0x1] sm:$0x1]
        %503 = vset.pattern.permute.xlu0 0
        %504 = vperm.xlu0 %503, %v499
        %v505 = vpop.permute.xlu0 %504
        %508 = vset.pattern.permute.xlu0 0
        %509 = vperm.xlu0 %508, %v500
        %v510 = vpop.permute.xlu0 %509
        %v512 = vlaneseq
        %v513 = vshrl.u32 %v512, 7
        %v514 = vsub.s32 0, %v513
        %v515 = vrot.slane %v501, %v514
        %v516 = vmul.f32 %v505, %v515
        %v517 = vmul.f32 %v510, %v515
        %v518 = vadd.f32 %v497, %v516
        %v519 = vadd.f32 %v498, %v517
        %v520 = vld [vmem:[#allocation2 + $0x2] sm:$0xff]
        %v521 = vld [vmem:[#allocation2 + $0xa] sm:$0x3f]
        %v522 = vld [vmem:[%s1 + $0x2] sm:$0x1]
        %524 = vset.pattern.permute.xlu0 0
        %525 = vperm.xlu0 %524, %v520
        %v526 = vpop.permute.xlu0 %525
        %529 = vset.pattern.permute.xlu0 0
        %530 = vperm.xlu0 %529, %v521
        %v531 = vpop.permute.xlu0 %530
        %v533 = vlaneseq
        %v534 = vshrl.u32 %v533, 7
        %v535 = vsub.s32 0, %v534
        %v536 = vrot.slane %v522, %v535
        %v537 = vmul.f32 %v526, %v536
        %v538 = vmul.f32 %v531, %v536
        %v539 = vadd.f32 %v518, %v537
        %v540 = vadd.f32 %v519, %v538
        %v541 = vld [vmem:[#allocation2 + $0x3] sm:$0xff]
        %v542 = vld [vmem:[#allocation2 + $0xb] sm:$0x3f]
        %v543 = vld [vmem:[%s1 + $0x3] sm:$0x1]
        %545 = vset.pattern.permute.xlu0 0
        %546 = vperm.xlu0 %545, %v541
        %v547 = vpop.permute.xlu0 %546
        %550 = vset.pattern.permute.xlu0 0
        %551 = vperm.xlu0 %550, %v542
        %v552 = vpop.permute.xlu0 %551
        %v554 = vlaneseq
        %v555 = vshrl.u32 %v554, 7
        %v556 = vsub.s32 0, %v555
        %v557 = vrot.slane %v543, %v556
        %v558 = vmul.f32 %v547, %v557
        %v559 = vmul.f32 %v552, %v557
        %v560 = vadd.f32 %v539, %v558
        %v561 = vadd.f32 %v540, %v559
        %v562 = vld [vmem:[#allocation2 + $0x4] sm:$0xff]
        %v563 = vld [vmem:[#allocation2 + $0xc] sm:$0x3f]
        %v564 = vld [vmem:[%s1 + $0x4] sm:$0x1]
        %566 = vset.pattern.permute.xlu0 0
        %567 = vperm.xlu0 %566, %v562
        %v568 = vpop.permute.xlu0 %567
        %571 = vset.pattern.permute.xlu0 0
        %572 = vperm.xlu0 %571, %v563
        %v573 = vpop.permute.xlu0 %572
        %v575 = vlaneseq
        %v576 = vshrl.u32 %v575, 7
        %v577 = vsub.s32 0, %v576
        %v578 = vrot.slane %v564, %v577
        %v579 = vmul.f32 %v568, %v578
        %v580 = vmul.f32 %v573, %v578
        %v581 = vadd.f32 %v560, %v579
        %v582 = vadd.f32 %v561, %v580
        %v583 = vld [vmem:[#allocation2 + $0x5] sm:$0xff]
        %v584 = vld [vmem:[#allocation2 + $0xd] sm:$0x3f]
        %v585 = vld [vmem:[%s1 + $0x5] sm:$0x1]
        %587 = vset.pattern.permute.xlu0 0
        %588 = vperm.xlu0 %587, %v583
        %v589 = vpop.permute.xlu0 %588
        %592 = vset.pattern.permute.xlu0 0
        %593 = vperm.xlu0 %592, %v584
        %v594 = vpop.permute.xlu0 %593
        %v596 = vlaneseq
        %v597 = vshrl.u32 %v596, 7
        %v598 = vsub.s32 0, %v597
        %v599 = vrot.slane %v585, %v598
        %v600 = vmul.f32 %v589, %v599
        %v601 = vmul.f32 %v594, %v599
        %v602 = vadd.f32 %v581, %v600
        %v603 = vadd.f32 %v582, %v601
        %v604 = vld [vmem:[#allocation2 + $0x6] sm:$0xff]
        %v605 = vld [vmem:[#allocation2 + $0xe] sm:$0x3f]
        %v606 = vld [vmem:[%s1 + $0x6] sm:$0x1]
        %608 = vset.pattern.permute.xlu0 0
        %609 = vperm.xlu0 %608, %v604
        %v610 = vpop.permute.xlu0 %609
        %613 = vset.pattern.permute.xlu0 0
        %614 = vperm.xlu0 %613, %v605
        %v615 = vpop.permute.xlu0 %614
        %v617 = vlaneseq
        %v618 = vshrl.u32 %v617, 7
        %v619 = vsub.s32 0, %v618
        %v620 = vrot.slane %v606, %v619
        %v621 = vmul.f32 %v610, %v620
        %v622 = vmul.f32 %v615, %v620
        %v623 = vadd.f32 %v602, %v621
        %v624 = vadd.f32 %v603, %v622
        %v625 = vld [vmem:[%s2] sm:$0x1]
        %v627 = vlaneseq
        %v628 = vshrl.u32 %v627, 7
        %v629 = vsub.s32 0, %v628
        %v630 = vrot.slane %v625, %v629
        %v632 = vadd.f32 %v623, %v630
        %v633 = vadd.f32 %v624, %v630
        %v634 = vmax.f32 %v632, 0.0
        %v635 = vmax.f32 %v633, 0.0
        %vm636 = vcmask 1045504
        %v637 = vsel %vm636, %v635, -inf
        %v638 = vmax.f32 %v634, %v637
        %v639 = vrot.slane %v638, 4
        %v640 = vmax.f32 %v638, %v639
        %v641 = vrot.slane %v640, 2
        %v642 = vmax.f32 %v640, %v641
        %v643 = vrot.slane %v642, 1
        %v644 = vmax.f32 %v642, %v643
        %v645 = vpack.c.bf16 %v644, %v644
        %v646 = vld [vmem:[%s3] sm:$0xf]
        %v647 = vld [vmem:[%s3 + $0x4] sm:$0xf]
        %v648 = vld [vmem:[%s3 + $0x8] sm:$0xf]
        %v649 = vld [vmem:[%s3 + $0xc] sm:$0xf]
        %v650 = vld [vmem:[%s3 + $0x10] sm:$0xf]
        %v651 = vld [vmem:[%s3 + $0x14] sm:$0xf]
        %v652 = vld [vmem:[%s3 + $0x18] sm:$0xf]
        %v653 = vld [vmem:[%s3 + $0x1c] sm:$0xf]
        %v654 = vld [vmem:[%s3 + $0x20] sm:$0xf]
        %v655 = vld [vmem:[%s3 + $0x24] sm:$0xf]
        %v656 = vld [vmem:[%s3 + $0x28] sm:$0xf]
        %v657 = vld [vmem:[%s3 + $0x2c] sm:$0xf]
        %v658 = vld [vmem:[%s3 + $0x30] sm:$0xf]
        %v659 = vld [vmem:[%s3 + $0x34] sm:$0xf]
        %v660 = vld [vmem:[%s3 + $0x38] sm:$0xf]
        %v661 = vld [vmem:[%s3 + $0x3c] sm:$0xf]
        %v678 = vunpack.c.l.b16 %v646
        %v679 = vunpack.c.l.b16 %v647
        %v680 = vunpack.c.l.b16 %v648
        %v681 = vunpack.c.l.b16 %v649
        %v682 = vunpack.c.l.b16 %v650
        %v683 = vunpack.c.l.b16 %v651
        %v684 = vunpack.c.l.b16 %v652
        %v685 = vunpack.c.l.b16 %v653
        %v686 = vunpack.c.l.b16 %v654
        %v687 = vunpack.c.l.b16 %v655
        %v688 = vunpack.c.l.b16 %v656
        %v689 = vunpack.c.l.b16 %v657
        %v690 = vunpack.c.l.b16 %v658
        %v691 = vunpack.c.l.b16 %v659
        %v692 = vunpack.c.l.b16 %v660
        %v693 = vunpack.c.l.b16 %v661
        %v694 = vpack.c.b16 %v679, %v678
        %v695 = vpack.c.b16 %v681, %v680
        %v696 = vpack.c.b16 %v683, %v682
        %v697 = vpack.c.b16 %v685, %v684
        %v698 = vpack.c.b16 %v687, %v686
        %v699 = vpack.c.b16 %v689, %v688
        %v700 = vpack.c.b16 %v691, %v690
        %v701 = vpack.c.b16 %v693, %v692
        %710 = vmatprep.subr.bf16.mxu0 0
        %711 = vmatpush1.bf16.msra.mxu0 %v701
        %712 = vmatprep.subr.bf16.mxu0 0
        %713 = vmatpush1.bf16.msra.mxu0 %v700
        %714 = vmatprep.subr.bf16.mxu0 0
        %715 = vmatpush1.bf16.msra.mxu0 %v699
        %716 = vmatprep.subr.bf16.mxu0 0
        %717 = vmatpush1.bf16.msra.mxu0 %v698
        %718 = vmatprep.subr.bf16.mxu0 0
        %719 = vmatpush1.bf16.msra.mxu0 %v697
        %720 = vmatprep.subr.bf16.mxu0 0
        %721 = vmatpush1.bf16.msra.mxu0 %v696
        %722 = vmatprep.subr.bf16.mxu0 0
        %723 = vmatpush1.bf16.msra.mxu0 %v695
        %724 = vmatprep.subr.bf16.mxu0 0
        %725 = vmatpush1.bf16.msra.mxu0 %v694
        %726 = vmatprep.subr.bf16.mxu0 0
        %727 = vmatpush2.bf16.msra.mxu0 0
        %728 = vmatprep.subr.bf16.mxu0 0
        %729 = vmatpush2.bf16.msra.mxu0 0
        %730 = vmatprep.subr.bf16.mxu0 0
        %731 = vmatpush2.bf16.msra.mxu0 0
        %732 = vmatprep.subr.bf16.mxu0 0
        %733 = vmatpush2.bf16.msra.mxu0 0
        %734 = vmatprep.subr.bf16.mxu0 0
        %735 = vmatpush2.bf16.msra.mxu0 0
        %736 = vmatprep.subr.bf16.mxu0 0
        %737 = vmatpush2.bf16.msra.mxu0 0
        %738 = vmatprep.subr.bf16.mxu0 0
        %739 = vmatpush2.bf16.msra.mxu0 0
        %740 = vmatprep.subr.bf16.mxu0 0
        %741 = vmatpush2.bf16.msra.mxu0 0
        %742 = vmatprep.mubr.bf16.mxu0 0
        %743 = vmatmul.mubr.bf16.gmra.mxu0 %v645
        %v744 = vpop.f32.mrf.mxu0
        %v745 = vadd.f32 0.0, %v744
        %v746 = vpop.f32.mrf.mxu0
        %v747 = vpop.f32.mrf.mxu0
        %v748 = vpop.f32.mrf.mxu0
        %749 = vdwg.mxu0
        %v750 = vmax.f32 %v745, 0.0
        %v751 = vpack.c.bf16 %v750, %v750
        %v752 = vld [vmem:[%s4] sm:$0xf]
        %vm753 = vcmask 64512
        %v755 = vsel %vm753, %v751, 0
        %vm757 = vcmask 1043456
        %v759 = vsel %vm757, %v752, 0
        %761 = vmatprep.subr.bf16.mxu0 0
        %762 = vmatpush1.bf16.msra.mxu0 0
        %763 = vmatprep.subr.bf16.mxu0 0
        %764 = vmatpush1.bf16.msra.mxu0 0
        %765 = vmatprep.subr.bf16.mxu0 0
        %766 = vmatpush1.bf16.msra.mxu0 0
        %767 = vmatprep.subr.bf16.mxu0 0
        %768 = vmatpush1.bf16.msra.mxu0 0
        %769 = vmatprep.subr.bf16.mxu0 0
        %770 = vmatpush1.bf16.msra.mxu0 0
        %771 = vmatprep.subr.bf16.mxu0 0
        %772 = vmatpush1.bf16.msra.mxu0 0
        %773 = vmatprep.subr.bf16.mxu0 0
        %774 = vmatpush1.bf16.msra.mxu0 0
        %775 = vmatprep.subr.bf16.mxu0 0
        %776 = vmatpush1.bf16.msra.mxu0 %v759
        %777 = vmatprep.subr.bf16.mxu0 0
        %778 = vmatpush2.bf16.msra.mxu0 0
        %779 = vmatprep.subr.bf16.mxu0 0
        %780 = vmatpush2.bf16.msra.mxu0 0
        %781 = vmatprep.subr.bf16.mxu0 0
        %782 = vmatpush2.bf16.msra.mxu0 0
        %783 = vmatprep.subr.bf16.mxu0 0
        %784 = vmatpush2.bf16.msra.mxu0 0
        %785 = vmatprep.subr.bf16.mxu0 0
        %786 = vmatpush2.bf16.msra.mxu0 0
        %787 = vmatprep.subr.bf16.mxu0 0
        %788 = vmatpush2.bf16.msra.mxu0 0
        %789 = vmatprep.subr.bf16.mxu0 0
        %790 = vmatpush2.bf16.msra.mxu0 0
        %791 = vmatprep.subr.bf16.mxu0 0
        %792 = vmatpush2.bf16.msra.mxu0 0
        %793 = vmatprep.mubr.bf16.mxu0 0
        %794 = vmatmul.mubr.bf16.gmra.mxu0 %v755
        %v795 = vpop.f32.mrf.mxu0
        %v796 = vadd.f32 0.0, %v795
        %v797 = vpop.f32.mrf.mxu0
        %v798 = vpop.f32.mrf.mxu0
        %v799 = vpop.f32.mrf.mxu0
        %800 = vdwg.mxu0
        %v801 = vxor.u32 %v796, 2147483648
        %v802 = vmul.f32 %v801, 1.442695
        %v803 = vpow.pop %v802
        %v804 = vadd.f32 %v803, 1.0
        %v805 = vrcp.pop %v804
        %v806 = vmul.f32 1.0, %v805
        %v807 = vlaneseq
        %v808 = vshrl.u32 %v807, 7
        %v809 = vsub.s32 0, %v808
        %v810 = vrot.slane %v806, %v809
        %v811 = vmul.f32 %v634, %v810
        %v812 = vmul.f32 %v635, %v810
        %813 = vst [vmem:[#allocation3] sm:$0xff] 0.0
        %814 = vst [vmem:[#allocation3 + $0x8] sm:$0xff] 0.0
        %815 = vst [vmem:[#allocation3 + $0x10] sm:$0x3] 0.0
        %816 = vst [vmem:[#allocation3 + $0x2] sm:$0xff] %v811
        %817 = vst [vmem:[#allocation3 + $0xa] sm:$0x3f] %v812
        %v818 = vld [vmem:[#allocation3] sm:$0xff]
        %v819 = vld [vmem:[#allocation3 + $0x8] sm:$0x3f]
        %v820 = vpack.c.bf16 %v819, %v818
        %v821 = vld [vmem:[#allocation5] sm:$0xff]
        %v822 = vld [vmem:[#allocation5 + $0x8] sm:$0xff]
        %v823 = vld [vmem:[#allocation5 + $0x10] sm:$0xff]
        %v824 = vld [vmem:[#allocation5 + $0x18] sm:$0xff]
        %v825 = vld [vmem:[#allocation5 + $0x20] sm:$0xff]
        %v826 = vld [vmem:[#allocation5 + $0x28] sm:$0xff]
        %v827 = vld [vmem:[#allocation5 + $0x30] sm:$0xff]
        %v828 = vld [vmem:[#allocation5 + $0x38] sm:$0xff]
        %v829 = vld [vmem:[#allocation5 + $0x40] sm:$0xff]
        %v830 = vld [vmem:[#allocation5 + $0x48] sm:$0xff]
        %v831 = vld [vmem:[#allocation5 + $0x50] sm:$0xff]
        %v832 = vld [vmem:[#allocation5 + $0x58] sm:$0xff]
        %v833 = vld [vmem:[#allocation5 + $0x60] sm:$0xff]
        %v834 = vld [vmem:[#allocation5 + $0x68] sm:$0xff]
        %v835 = vld [vmem:[#allocation5 + $0x70] sm:$0xff]
        %v836 = vld [vmem:[#allocation5 + $0x78] sm:$0xff]
        %v837 = vld [vmem:[#allocation3 + $0x1] sm:$0xff]
        %v838 = vld [vmem:[#allocation3 + $0x9] sm:$0x3f]
        %v839 = vpack.c.bf16 %v838, %v837
        %s840 = scalar_lea.vmem [#allocation5], 128
        %v841 = vld [vmem:[%s840] sm:$0xff]
        %v842 = vld [vmem:[%s840 + $0x8] sm:$0xff]
        %v843 = vld [vmem:[%s840 + $0x10] sm:$0xff]
        %v844 = vld [vmem:[%s840 + $0x18] sm:$0xff]
        %v845 = vld [vmem:[%s840 + $0x20] sm:$0xff]
        %v846 = vld [vmem:[%s840 + $0x28] sm:$0xff]
        %v847 = vld [vmem:[%s840 + $0x30] sm:$0xff]
        %v848 = vld [vmem:[%s840 + $0x38] sm:$0xff]
        %v849 = vld [vmem:[%s840 + $0x40] sm:$0xff]
        %v850 = vld [vmem:[%s840 + $0x48] sm:$0xff]
        %v851 = vld [vmem:[%s840 + $0x50] sm:$0xff]
        %v852 = vld [vmem:[%s840 + $0x58] sm:$0xff]
        %v853 = vld [vmem:[%s840 + $0x60] sm:$0xff]
        %v854 = vld [vmem:[%s840 + $0x68] sm:$0xff]
        %v855 = vld [vmem:[%s840 + $0x70] sm:$0xff]
        %v856 = vld [vmem:[%s840 + $0x78] sm:$0xff]
        %v873 = vunpack.c.l.b16 %v841
        %v874 = vunpack.c.h.b16 %v841
        %v875 = vunpack.c.l.b16 %v842
        %v876 = vunpack.c.h.b16 %v842
        %v877 = vunpack.c.l.b16 %v843
        %v878 = vunpack.c.h.b16 %v843
        %v879 = vunpack.c.l.b16 %v844
        %v880 = vunpack.c.h.b16 %v844
        %v881 = vunpack.c.l.b16 %v845
        %v882 = vunpack.c.h.b16 %v845
        %v883 = vunpack.c.l.b16 %v846
        %v884 = vunpack.c.h.b16 %v846
        %v885 = vunpack.c.l.b16 %v847
        %v886 = vunpack.c.h.b16 %v847
        %v887 = vunpack.c.l.b16 %v848
        %v888 = vunpack.c.h.b16 %v848
        %v889 = vunpack.c.l.b16 %v849
        %v890 = vunpack.c.h.b16 %v849
        %v891 = vunpack.c.l.b16 %v850
        %v892 = vunpack.c.h.b16 %v850
        %v893 = vunpack.c.l.b16 %v851
        %v894 = vunpack.c.h.b16 %v851
        %v895 = vunpack.c.l.b16 %v852
        %v896 = vunpack.c.h.b16 %v852
        %v897 = vunpack.c.l.b16 %v853
        %v898 = vunpack.c.h.b16 %v853
        %v899 = vunpack.c.l.b16 %v854
        %v900 = vunpack.c.h.b16 %v854
        %v901 = vunpack.c.l.b16 %v855
        %v902 = vunpack.c.h.b16 %v855
        %v903 = vunpack.c.l.b16 %v856
        %v904 = vunpack.c.h.b16 %v856
        %v905 = vpack.c.b16 %v875, %v873
        %v906 = vpack.c.b16 %v876, %v874
        %v907 = vpack.c.b16 %v879, %v877
        %v908 = vpack.c.b16 %v880, %v878
        %v909 = vpack.c.b16 %v883, %v881
        %v910 = vpack.c.b16 %v884, %v882
        %v911 = vpack.c.b16 %v887, %v885
        %v912 = vpack.c.b16 %v888, %v886
        %v913 = vpack.c.b16 %v891, %v889
        %v914 = vpack.c.b16 %v892, %v890
        %v915 = vpack.c.b16 %v895, %v893
        %v916 = vpack.c.b16 %v896, %v894
        %v917 = vpack.c.b16 %v899, %v897
        %v918 = vpack.c.b16 %v900, %v898
        %v919 = vpack.c.b16 %v903, %v901
        %v920 = vpack.c.b16 %v904, %v902
        %937 = vmatprep.subr.bf16.mxu0 %v920
        %938 = vmatpush1.bf16.msra.mxu0 %v919
        %939 = vmatprep.subr.bf16.mxu0 %v918
        %940 = vmatpush1.bf16.msra.mxu0 %v917
        %941 = vmatprep.subr.bf16.mxu0 %v916
        %942 = vmatpush1.bf16.msra.mxu0 %v915
        %943 = vmatprep.subr.bf16.mxu0 %v914
        %944 = vmatpush1.bf16.msra.mxu0 %v913
        %945 = vmatprep.subr.bf16.mxu0 %v912
        %946 = vmatpush1.bf16.msra.mxu0 %v911
        %947 = vmatprep.subr.bf16.mxu0 %v910
        %948 = vmatpush1.bf16.msra.mxu0 %v909
        %949 = vmatprep.subr.bf16.mxu0 %v908
        %950 = vmatpush1.bf16.msra.mxu0 %v907
        %951 = vmatprep.subr.bf16.mxu0 %v906
        %952 = vmatpush1.bf16.msra.mxu0 %v905
        %953 = vmatprep.subr.bf16.mxu0 0
        %954 = vmatpush2.bf16.msra.mxu0 0
        %955 = vmatprep.subr.bf16.mxu0 0
        %956 = vmatpush2.bf16.msra.mxu0 0
        %957 = vmatprep.subr.bf16.mxu0 0
        %958 = vmatpush2.bf16.msra.mxu0 0
        %959 = vmatprep.subr.bf16.mxu0 0
        %960 = vmatpush2.bf16.msra.mxu0 0
        %961 = vmatprep.subr.bf16.mxu0 0
        %962 = vmatpush2.bf16.msra.mxu0 0
        %963 = vmatprep.subr.bf16.mxu0 0
        %964 = vmatpush2.bf16.msra.mxu0 0
        %965 = vmatprep.subr.bf16.mxu0 0
        %966 = vmatpush2.bf16.msra.mxu0 0
        %967 = vmatprep.subr.bf16.mxu0 0
        %968 = vmatpush2.bf16.msra.mxu0 0
        %969 = vmatprep.mubr.bf16.mxu0 0
        %970 = vmatmul.mubr.bf16.gmra.mxu0 %v839
        %v971 = vpop.f32.mrf.mxu0
        %v972 = vadd.f32 0.0, %v971
        %v973 = vpop.f32.mrf.mxu0
        %v974 = vadd.f32 0.0, %v973
        %v975 = vpop.f32.mrf.mxu0
        %v976 = vadd.f32 0.0, %v975
        %v977 = vpop.f32.mrf.mxu0
        %v978 = vadd.f32 0.0, %v977
        %979 = vdwg.mxu0
        %v996 = vunpack.c.l.b16 %v821
        %v997 = vunpack.c.h.b16 %v821
        %v998 = vunpack.c.l.b16 %v822
        %v999 = vunpack.c.h.b16 %v822
        %v1000 = vunpack.c.l.b16 %v823
        %v1001 = vunpack.c.h.b16 %v823
        %v1002 = vunpack.c.l.b16 %v824
        %v1003 = vunpack.c.h.b16 %v824
        %v1004 = vunpack.c.l.b16 %v825
        %v1005 = vunpack.c.h.b16 %v825
        %v1006 = vunpack.c.l.b16 %v826
        %v1007 = vunpack.c.h.b16 %v826
        %v1008 = vunpack.c.l.b16 %v827
        %v1009 = vunpack.c.h.b16 %v827
        %v1010 = vunpack.c.l.b16 %v828
        %v1011 = vunpack.c.h.b16 %v828
        %v1012 = vunpack.c.l.b16 %v829
        %v1013 = vunpack.c.h.b16 %v829
        %v1014 = vunpack.c.l.b16 %v830
        %v1015 = vunpack.c.h.b16 %v830
        %v1016 = vunpack.c.l.b16 %v831
        %v1017 = vunpack.c.h.b16 %v831
        %v1018 = vunpack.c.l.b16 %v832
        %v1019 = vunpack.c.h.b16 %v832
        %v1020 = vunpack.c.l.b16 %v833
        %v1021 = vunpack.c.h.b16 %v833
        %v1022 = vunpack.c.l.b16 %v834
        %v1023 = vunpack.c.h.b16 %v834
        %v1024 = vunpack.c.l.b16 %v835
        %v1025 = vunpack.c.h.b16 %v835
        %v1026 = vunpack.c.l.b16 %v836
        %v1027 = vunpack.c.h.b16 %v836
        %v1028 = vpack.c.b16 %v998, %v996
        %v1029 = vpack.c.b16 %v999, %v997
        %v1030 = vpack.c.b16 %v1002, %v1000
        %v1031 = vpack.c.b16 %v1003, %v1001
        %v1032 = vpack.c.b16 %v1006, %v1004
        %v1033 = vpack.c.b16 %v1007, %v1005
        %v1034 = vpack.c.b16 %v1010, %v1008
        %v1035 = vpack.c.b16 %v1011, %v1009
        %v1036 = vpack.c.b16 %v1014, %v1012
        %v1037 = vpack.c.b16 %v1015, %v1013
        %v1038 = vpack.c.b16 %v1018, %v1016
        %v1039 = vpack.c.b16 %v1019, %v1017
        %v1040 = vpack.c.b16 %v1022, %v1020
        %v1041 = vpack.c.b16 %v1023, %v1021
        %v1042 = vpack.c.b16 %v1026, %v1024
        %v1043 = vpack.c.b16 %v1027, %v1025
        %1060 = vmatprep.subr.bf16.mxu0 %v1043
        %1061 = vmatpush1.bf16.msra.mxu0 %v1042
        %1062 = vmatprep.subr.bf16.mxu0 %v1041
        %1063 = vmatpush1.bf16.msra.mxu0 %v1040
        %1064 = vmatprep.subr.bf16.mxu0 %v1039
        %1065 = vmatpush1.bf16.msra.mxu0 %v1038
        %1066 = vmatprep.subr.bf16.mxu0 %v1037
        %1067 = vmatpush1.bf16.msra.mxu0 %v1036
        %1068 = vmatprep.subr.bf16.mxu0 %v1035
        %1069 = vmatpush1.bf16.msra.mxu0 %v1034
        %1070 = vmatprep.subr.bf16.mxu0 %v1033
        %1071 = vmatpush1.bf16.msra.mxu0 %v1032
        %1072 = vmatprep.subr.bf16.mxu0 %v1031
        %1073 = vmatpush1.bf16.msra.mxu0 %v1030
        %1074 = vmatprep.subr.bf16.mxu0 %v1029
        %1075 = vmatpush1.bf16.msra.mxu0 %v1028
        %1076 = vmatprep.subr.bf16.mxu0 0
        %1077 = vmatpush2.bf16.msra.mxu0 0
        %1078 = vmatprep.subr.bf16.mxu0 0
        %1079 = vmatpush2.bf16.msra.mxu0 0
        %1080 = vmatprep.subr.bf16.mxu0 0
        %1081 = vmatpush2.bf16.msra.mxu0 0
        %1082 = vmatprep.subr.bf16.mxu0 0
        %1083 = vmatpush2.bf16.msra.mxu0 0
        %1084 = vmatprep.subr.bf16.mxu0 0
        %1085 = vmatpush2.bf16.msra.mxu0 0
        %1086 = vmatprep.subr.bf16.mxu0 0
        %1087 = vmatpush2.bf16.msra.mxu0 0
        %1088 = vmatprep.subr.bf16.mxu0 0
        %1089 = vmatpush2.bf16.msra.mxu0 0
        %1090 = vmatprep.subr.bf16.mxu0 0
        %1091 = vmatpush2.bf16.msra.mxu0 0
        %1092 = vmatprep.mubr.bf16.mxu0 0
        %1093 = vmatmul.mubr.bf16.gmra.mxu0 %v820
        %v1094 = vpop.f32.mrf.mxu0
        %v1095 = vadd.f32 %v972, %v1094
        %v1096 = vpop.f32.mrf.mxu0
        %v1097 = vadd.f32 %v974, %v1096
        %v1098 = vpop.f32.mrf.mxu0
        %v1099 = vadd.f32 %v976, %v1098
        %v1100 = vpop.f32.mrf.mxu0
        %v1101 = vadd.f32 %v978, %v1100
        %1102 = vdwg.mxu0
        %v1103 = vld [vmem:[#allocation3 + $0x2] sm:$0xff]
        %v1104 = vld [vmem:[#allocation3 + $0xa] sm:$0x3f]
        %v1105 = vpack.c.bf16 %v1104, %v1103
        %s1106 = scalar_lea.vmem [#allocation5], 256
        %v1107 = vld [vmem:[%s1106] sm:$0xff]
        %v1108 = vld [vmem:[%s1106 + $0x8] sm:$0xff]
        %v1109 = vld [vmem:[%s1106 + $0x10] sm:$0xff]
        %v1110 = vld [vmem:[%s1106 + $0x18] sm:$0xff]
        %v1111 = vld [vmem:[%s1106 + $0x20] sm:$0xff]
        %v1112 = vld [vmem:[%s1106 + $0x28] sm:$0xff]
        %v1113 = vld [vmem:[%s1106 + $0x30] sm:$0xff]
        %v1114 = vld [vmem:[%s1106 + $0x38] sm:$0xff]
        %v1115 = vld [vmem:[%s1106 + $0x40] sm:$0xff]
        %v1116 = vld [vmem:[%s1106 + $0x48] sm:$0xff]
        %v1117 = vld [vmem:[%s1106 + $0x50] sm:$0xff]
        %v1118 = vld [vmem:[%s1106 + $0x58] sm:$0xff]
        %v1119 = vld [vmem:[%s1106 + $0x60] sm:$0xff]
        %v1120 = vld [vmem:[%s1106 + $0x68] sm:$0xff]
        %v1121 = vld [vmem:[%s1106 + $0x70] sm:$0xff]
        %v1122 = vld [vmem:[%s1106 + $0x78] sm:$0xff]
        %v1139 = vunpack.c.l.b16 %v1107
        %v1140 = vunpack.c.h.b16 %v1107
        %v1141 = vunpack.c.l.b16 %v1108
        %v1142 = vunpack.c.h.b16 %v1108
        %v1143 = vunpack.c.l.b16 %v1109
        %v1144 = vunpack.c.h.b16 %v1109
        %v1145 = vunpack.c.l.b16 %v1110
        %v1146 = vunpack.c.h.b16 %v1110
        %v1147 = vunpack.c.l.b16 %v1111
        %v1148 = vunpack.c.h.b16 %v1111
        %v1149 = vunpack.c.l.b16 %v1112
        %v1150 = vunpack.c.h.b16 %v1112
        %v1151 = vunpack.c.l.b16 %v1113
        %v1152 = vunpack.c.h.b16 %v1113
        %v1153 = vunpack.c.l.b16 %v1114
        %v1154 = vunpack.c.h.b16 %v1114
        %v1155 = vunpack.c.l.b16 %v1115
        %v1156 = vunpack.c.h.b16 %v1115
        %v1157 = vunpack.c.l.b16 %v1116
        %v1158 = vunpack.c.h.b16 %v1116
        %v1159 = vunpack.c.l.b16 %v1117
        %v1160 = vunpack.c.h.b16 %v1117
        %v1161 = vunpack.c.l.b16 %v1118
        %v1162 = vunpack.c.h.b16 %v1118
        %v1163 = vunpack.c.l.b16 %v1119
        %v1164 = vunpack.c.h.b16 %v1119
        %v1165 = vunpack.c.l.b16 %v1120
        %v1166 = vunpack.c.h.b16 %v1120
        %v1167 = vunpack.c.l.b16 %v1121
        %v1168 = vunpack.c.h.b16 %v1121
        %v1169 = vunpack.c.l.b16 %v1122
        %v1170 = vunpack.c.h.b16 %v1122
        %v1171 = vpack.c.b16 %v1141, %v1139
        %v1172 = vpack.c.b16 %v1142, %v1140
        %v1173 = vpack.c.b16 %v1145, %v1143
        %v1174 = vpack.c.b16 %v1146, %v1144
        %v1175 = vpack.c.b16 %v1149, %v1147
        %v1176 = vpack.c.b16 %v1150, %v1148
        %v1177 = vpack.c.b16 %v1153, %v1151
        %v1178 = vpack.c.b16 %v1154, %v1152
        %v1179 = vpack.c.b16 %v1157, %v1155
        %v1180 = vpack.c.b16 %v1158, %v1156
        %v1181 = vpack.c.b16 %v1161, %v1159
        %v1182 = vpack.c.b16 %v1162, %v1160
        %v1183 = vpack.c.b16 %v1165, %v1163
        %v1184 = vpack.c.b16 %v1166, %v1164
        %v1185 = vpack.c.b16 %v1169, %v1167
        %v1186 = vpack.c.b16 %v1170, %v1168
        %1203 = vmatprep.subr.bf16.mxu0 %v1186
        %1204 = vmatpush1.bf16.msra.mxu0 %v1185
        %1205 = vmatprep.subr.bf16.mxu0 %v1184
        %1206 = vmatpush1.bf16.msra.mxu0 %v1183
        %1207 = vmatprep.subr.bf16.mxu0 %v1182
        %1208 = vmatpush1.bf16.msra.mxu0 %v1181
        %1209 = vmatprep.subr.bf16.mxu0 %v1180
        %1210 = vmatpush1.bf16.msra.mxu0 %v1179
        %1211 = vmatprep.subr.bf16.mxu0 %v1178
        %1212 = vmatpush1.bf16.msra.mxu0 %v1177
        %1213 = vmatprep.subr.bf16.mxu0 %v1176
        %1214 = vmatpush1.bf16.msra.mxu0 %v1175
        %1215 = vmatprep.subr.bf16.mxu0 %v1174
        %1216 = vmatpush1.bf16.msra.mxu0 %v1173
        %1217 = vmatprep.subr.bf16.mxu0 %v1172
        %1218 = vmatpush1.bf16.msra.mxu0 %v1171
        %1219 = vmatprep.subr.bf16.mxu0 0
        %1220 = vmatpush2.bf16.msra.mxu0 0
        %1221 = vmatprep.subr.bf16.mxu0 0
        %1222 = vmatpush2.bf16.msra.mxu0 0
        %1223 = vmatprep.subr.bf16.mxu0 0
        %1224 = vmatpush2.bf16.msra.mxu0 0
        %1225 = vmatprep.subr.bf16.mxu0 0
        %1226 = vmatpush2.bf16.msra.mxu0 0
        %1227 = vmatprep.subr.bf16.mxu0 0
        %1228 = vmatpush2.bf16.msra.mxu0 0
        %1229 = vmatprep.subr.bf16.mxu0 0
        %1230 = vmatpush2.bf16.msra.mxu0 0
        %1231 = vmatprep.subr.bf16.mxu0 0
        %1232 = vmatpush2.bf16.msra.mxu0 0
        %1233 = vmatprep.subr.bf16.mxu0 0
        %1234 = vmatpush2.bf16.msra.mxu0 0
        %1235 = vmatprep.mubr.bf16.mxu0 0
        %1236 = vmatmul.mubr.bf16.gmra.mxu0 %v1105
        %v1237 = vpop.f32.mrf.mxu0
        %v1238 = vadd.f32 0.0, %v1237
        %v1239 = vpop.f32.mrf.mxu0
        %v1240 = vadd.f32 0.0, %v1239
        %v1241 = vpop.f32.mrf.mxu0
        %v1242 = vadd.f32 0.0, %v1241
        %v1243 = vpop.f32.mrf.mxu0
        %v1244 = vadd.f32 0.0, %v1243
        %1245 = vdwg.mxu0
        %v1246 = vadd.f32 %v1095, %v1238
        %v1247 = vadd.f32 %v1097, %v1240
        %v1248 = vadd.f32 %v1099, %v1242
        %v1249 = vadd.f32 %v1101, %v1244
        %v1250 = vld [vmem:[#allocation3 + $0x3] sm:$0xff]
        %v1251 = vld [vmem:[#allocation3 + $0xb] sm:$0x3f]
        %v1252 = vpack.c.bf16 %v1251, %v1250
        %s1253 = scalar_lea.vmem [#allocation5], 384
        %v1254 = vld [vmem:[%s1253] sm:$0xff]
        %v1255 = vld [vmem:[%s1253 + $0x8] sm:$0xff]
        %v1256 = vld [vmem:[%s1253 + $0x10] sm:$0xff]
        %v1257 = vld [vmem:[%s1253 + $0x18] sm:$0xff]
        %v1258 = vld [vmem:[%s1253 + $0x20] sm:$0xff]
        %v1259 = vld [vmem:[%s1253 + $0x28] sm:$0xff]
        %v1260 = vld [vmem:[%s1253 + $0x30] sm:$0xff]
        %v1261 = vld [vmem:[%s1253 + $0x38] sm:$0xff]
        %v1262 = vld [vmem:[%s1253 + $0x40] sm:$0xff]
        %v1263 = vld [vmem:[%s1253 + $0x48] sm:$0xff]
        %v1264 = vld [vmem:[%s1253 + $0x50] sm:$0xff]
        %v1265 = vld [vmem:[%s1253 + $0x58] sm:$0xff]
        %v1266 = vld [vmem:[%s1253 + $0x60] sm:$0xff]
        %v1267 = vld [vmem:[%s1253 + $0x68] sm:$0xff]
        %v1268 = vld [vmem:[%s1253 + $0x70] sm:$0xff]
        %v1269 = vld [vmem:[%s1253 + $0x78] sm:$0xff]
        %v1286 = vunpack.c.l.b16 %v1254
        %v1287 = vunpack.c.h.b16 %v1254
        %v1288 = vunpack.c.l.b16 %v1255
        %v1289 = vunpack.c.h.b16 %v1255
        %v1290 = vunpack.c.l.b16 %v1256
        %v1291 = vunpack.c.h.b16 %v1256
        %v1292 = vunpack.c.l.b16 %v1257
        %v1293 = vunpack.c.h.b16 %v1257
        %v1294 = vunpack.c.l.b16 %v1258
        %v1295 = vunpack.c.h.b16 %v1258
        %v1296 = vunpack.c.l.b16 %v1259
        %v1297 = vunpack.c.h.b16 %v1259
        %v1298 = vunpack.c.l.b16 %v1260
        %v1299 = vunpack.c.h.b16 %v1260
        %v1300 = vunpack.c.l.b16 %v1261
        %v1301 = vunpack.c.h.b16 %v1261
        %v1302 = vunpack.c.l.b16 %v1262
        %v1303 = vunpack.c.h.b16 %v1262
        %v1304 = vunpack.c.l.b16 %v1263
        %v1305 = vunpack.c.h.b16 %v1263
        %v1306 = vunpack.c.l.b16 %v1264
        %v1307 = vunpack.c.h.b16 %v1264
        %v1308 = vunpack.c.l.b16 %v1265
        %v1309 = vunpack.c.h.b16 %v1265
        %v1310 = vunpack.c.l.b16 %v1266
        %v1311 = vunpack.c.h.b16 %v1266
        %v1312 = vunpack.c.l.b16 %v1267
        %v1313 = vunpack.c.h.b16 %v1267
        %v1314 = vunpack.c.l.b16 %v1268
        %v1315 = vunpack.c.h.b16 %v1268
        %v1316 = vunpack.c.l.b16 %v1269
        %v1317 = vunpack.c.h.b16 %v1269
        %v1318 = vpack.c.b16 %v1288, %v1286
        %v1319 = vpack.c.b16 %v1289, %v1287
        %v1320 = vpack.c.b16 %v1292, %v1290
        %v1321 = vpack.c.b16 %v1293, %v1291
        %v1322 = vpack.c.b16 %v1296, %v1294
        %v1323 = vpack.c.b16 %v1297, %v1295
        %v1324 = vpack.c.b16 %v1300, %v1298
        %v1325 = vpack.c.b16 %v1301, %v1299
        %v1326 = vpack.c.b16 %v1304, %v1302
        %v1327 = vpack.c.b16 %v1305, %v1303
        %v1328 = vpack.c.b16 %v1308, %v1306
        %v1329 = vpack.c.b16 %v1309, %v1307
        %v1330 = vpack.c.b16 %v1312, %v1310
        %v1331 = vpack.c.b16 %v1313, %v1311
        %v1332 = vpack.c.b16 %v1316, %v1314
        %v1333 = vpack.c.b16 %v1317, %v1315
        %1350 = vmatprep.subr.bf16.mxu0 %v1333
        %1351 = vmatpush1.bf16.msra.mxu0 %v1332
        %1352 = vmatprep.subr.bf16.mxu0 %v1331
        %1353 = vmatpush1.bf16.msra.mxu0 %v1330
        %1354 = vmatprep.subr.bf16.mxu0 %v1329
        %1355 = vmatpush1.bf16.msra.mxu0 %v1328
        %1356 = vmatprep.subr.bf16.mxu0 %v1327
        %1357 = vmatpush1.bf16.msra.mxu0 %v1326
        %1358 = vmatprep.subr.bf16.mxu0 %v1325
        %1359 = vmatpush1.bf16.msra.mxu0 %v1324
        %1360 = vmatprep.subr.bf16.mxu0 %v1323
        %1361 = vmatpush1.bf16.msra.mxu0 %v1322
        %1362 = vmatprep.subr.bf16.mxu0 %v1321
        %1363 = vmatpush1.bf16.msra.mxu0 %v1320
        %1364 = vmatprep.subr.bf16.mxu0 %v1319
        %1365 = vmatpush1.bf16.msra.mxu0 %v1318
        %1366 = vmatprep.subr.bf16.mxu0 0
        %1367 = vmatpush2.bf16.msra.mxu0 0
        %1368 = vmatprep.subr.bf16.mxu0 0
        %1369 = vmatpush2.bf16.msra.mxu0 0
        %1370 = vmatprep.subr.bf16.mxu0 0
        %1371 = vmatpush2.bf16.msra.mxu0 0
        %1372 = vmatprep.subr.bf16.mxu0 0
        %1373 = vmatpush2.bf16.msra.mxu0 0
        %1374 = vmatprep.subr.bf16.mxu0 0
        %1375 = vmatpush2.bf16.msra.mxu0 0
        %1376 = vmatprep.subr.bf16.mxu0 0
        %1377 = vmatpush2.bf16.msra.mxu0 0
        %1378 = vmatprep.subr.bf16.mxu0 0
        %1379 = vmatpush2.bf16.msra.mxu0 0
        %1380 = vmatprep.subr.bf16.mxu0 0
        %1381 = vmatpush2.bf16.msra.mxu0 0
        %1382 = vmatprep.mubr.bf16.mxu0 0
        %1383 = vmatmul.mubr.bf16.gmra.mxu0 %v1252
        %v1384 = vpop.f32.mrf.mxu0
        %v1385 = vadd.f32 0.0, %v1384
        %v1386 = vpop.f32.mrf.mxu0
        %v1387 = vadd.f32 0.0, %v1386
        %v1388 = vpop.f32.mrf.mxu0
        %v1389 = vadd.f32 0.0, %v1388
        %v1390 = vpop.f32.mrf.mxu0
        %v1391 = vadd.f32 0.0, %v1390
        %1392 = vdwg.mxu0
        %v1393 = vadd.f32 %v1246, %v1385
        %v1394 = vadd.f32 %v1247, %v1387
        %v1395 = vadd.f32 %v1248, %v1389
        %v1396 = vadd.f32 %v1249, %v1391
        %v1397 = vld [vmem:[#allocation3 + $0x4] sm:$0xff]
        %v1398 = vld [vmem:[#allocation3 + $0xc] sm:$0x3f]
        %v1399 = vpack.c.bf16 %v1398, %v1397
        %s1400 = scalar_lea.vmem [#allocation5], 512
        %v1401 = vld [vmem:[%s1400] sm:$0xff]
        %v1402 = vld [vmem:[%s1400 + $0x8] sm:$0xff]
        %v1403 = vld [vmem:[%s1400 + $0x10] sm:$0xff]
        %v1404 = vld [vmem:[%s1400 + $0x18] sm:$0xff]
        %v1405 = vld [vmem:[%s1400 + $0x20] sm:$0xff]
        %v1406 = vld [vmem:[%s1400 + $0x28] sm:$0xff]
        %v1407 = vld [vmem:[%s1400 + $0x30] sm:$0xff]
        %v1408 = vld [vmem:[%s1400 + $0x38] sm:$0xff]
        %v1409 = vld [vmem:[%s1400 + $0x40] sm:$0xff]
        %v1410 = vld [vmem:[%s1400 + $0x48] sm:$0xff]
        %v1411 = vld [vmem:[%s1400 + $0x50] sm:$0xff]
        %v1412 = vld [vmem:[%s1400 + $0x58] sm:$0xff]
        %v1413 = vld [vmem:[%s1400 + $0x60] sm:$0xff]
        %v1414 = vld [vmem:[%s1400 + $0x68] sm:$0xff]
        %v1415 = vld [vmem:[%s1400 + $0x70] sm:$0xff]
        %v1416 = vld [vmem:[%s1400 + $0x78] sm:$0xff]
        %v1433 = vunpack.c.l.b16 %v1401
        %v1434 = vunpack.c.h.b16 %v1401
        %v1435 = vunpack.c.l.b16 %v1402
        %v1436 = vunpack.c.h.b16 %v1402
        %v1437 = vunpack.c.l.b16 %v1403
        %v1438 = vunpack.c.h.b16 %v1403
        %v1439 = vunpack.c.l.b16 %v1404
        %v1440 = vunpack.c.h.b16 %v1404
        %v1441 = vunpack.c.l.b16 %v1405
        %v1442 = vunpack.c.h.b16 %v1405
        %v1443 = vunpack.c.l.b16 %v1406
        %v1444 = vunpack.c.h.b16 %v1406
        %v1445 = vunpack.c.l.b16 %v1407
        %v1446 = vunpack.c.h.b16 %v1407
        %v1447 = vunpack.c.l.b16 %v1408
        %v1448 = vunpack.c.h.b16 %v1408
        %v1449 = vunpack.c.l.b16 %v1409
        %v1450 = vunpack.c.h.b16 %v1409
        %v1451 = vunpack.c.l.b16 %v1410
        %v1452 = vunpack.c.h.b16 %v1410
        %v1453 = vunpack.c.l.b16 %v1411
        %v1454 = vunpack.c.h.b16 %v1411
        %v1455 = vunpack.c.l.b16 %v1412
        %v1456 = vunpack.c.h.b16 %v1412
        %v1457 = vunpack.c.l.b16 %v1413
        %v1458 = vunpack.c.h.b16 %v1413
        %v1459 = vunpack.c.l.b16 %v1414
        %v1460 = vunpack.c.h.b16 %v1414
        %v1461 = vunpack.c.l.b16 %v1415
        %v1462 = vunpack.c.h.b16 %v1415
        %v1463 = vunpack.c.l.b16 %v1416
        %v1464 = vunpack.c.h.b16 %v1416
        %v1465 = vpack.c.b16 %v1435, %v1433
        %v1466 = vpack.c.b16 %v1436, %v1434
        %v1467 = vpack.c.b16 %v1439, %v1437
        %v1468 = vpack.c.b16 %v1440, %v1438
        %v1469 = vpack.c.b16 %v1443, %v1441
        %v1470 = vpack.c.b16 %v1444, %v1442
        %v1471 = vpack.c.b16 %v1447, %v1445
        %v1472 = vpack.c.b16 %v1448, %v1446
        %v1473 = vpack.c.b16 %v1451, %v1449
        %v1474 = vpack.c.b16 %v1452, %v1450
        %v1475 = vpack.c.b16 %v1455, %v1453
        %v1476 = vpack.c.b16 %v1456, %v1454
        %v1477 = vpack.c.b16 %v1459, %v1457
        %v1478 = vpack.c.b16 %v1460, %v1458
        %v1479 = vpack.c.b16 %v1463, %v1461
        %v1480 = vpack.c.b16 %v1464, %v1462
        %1497 = vmatprep.subr.bf16.mxu0 %v1480
        %1498 = vmatpush1.bf16.msra.mxu0 %v1479
        %1499 = vmatprep.subr.bf16.mxu0 %v1478
        %1500 = vmatpush1.bf16.msra.mxu0 %v1477
        %1501 = vmatprep.subr.bf16.mxu0 %v1476
        %1502 = vmatpush1.bf16.msra.mxu0 %v1475
        %1503 = vmatprep.subr.bf16.mxu0 %v1474
        %1504 = vmatpush1.bf16.msra.mxu0 %v1473
        %1505 = vmatprep.subr.bf16.mxu0 %v1472
        %1506 = vmatpush1.bf16.msra.mxu0 %v1471
        %1507 = vmatprep.subr.bf16.mxu0 %v1470
        %1508 = vmatpush1.bf16.msra.mxu0 %v1469
        %1509 = vmatprep.subr.bf16.mxu0 %v1468
        %1510 = vmatpush1.bf16.msra.mxu0 %v1467
        %1511 = vmatprep.subr.bf16.mxu0 %v1466
        %1512 = vmatpush1.bf16.msra.mxu0 %v1465
        %1513 = vmatprep.subr.bf16.mxu0 0
        %1514 = vmatpush2.bf16.msra.mxu0 0
        %1515 = vmatprep.subr.bf16.mxu0 0
        %1516 = vmatpush2.bf16.msra.mxu0 0
        %1517 = vmatprep.subr.bf16.mxu0 0
        %1518 = vmatpush2.bf16.msra.mxu0 0
        %1519 = vmatprep.subr.bf16.mxu0 0
        %1520 = vmatpush2.bf16.msra.mxu0 0
        %1521 = vmatprep.subr.bf16.mxu0 0
        %1522 = vmatpush2.bf16.msra.mxu0 0
        %1523 = vmatprep.subr.bf16.mxu0 0
        %1524 = vmatpush2.bf16.msra.mxu0 0
        %1525 = vmatprep.subr.bf16.mxu0 0
        %1526 = vmatpush2.bf16.msra.mxu0 0
        %1527 = vmatprep.subr.bf16.mxu0 0
        %1528 = vmatpush2.bf16.msra.mxu0 0
        %1529 = vmatprep.mubr.bf16.mxu0 0
        %1530 = vmatmul.mubr.bf16.gmra.mxu0 %v1399
        %v1531 = vpop.f32.mrf.mxu0
        %v1532 = vadd.f32 0.0, %v1531
        %v1533 = vpop.f32.mrf.mxu0
        %v1534 = vadd.f32 0.0, %v1533
        %v1535 = vpop.f32.mrf.mxu0
        %v1536 = vadd.f32 0.0, %v1535
        %v1537 = vpop.f32.mrf.mxu0
        %v1538 = vadd.f32 0.0, %v1537
        %1539 = vdwg.mxu0
        %v1540 = vadd.f32 %v1393, %v1532
        %v1541 = vadd.f32 %v1394, %v1534
        %v1542 = vadd.f32 %v1395, %v1536
        %v1543 = vadd.f32 %v1396, %v1538
        %v1544 = vld [vmem:[%s6] sm:$0x3]
        %v1546 = vlaneseq
        %v1547 = vshrl.u32 %v1546, 7
        %v1548 = vsub.s32 0, %v1547
        %v1549 = vrot.slane %v1544, %v1548
        %v1550 = vlaneseq
        %v1551 = vshrl.u32 %v1550, 7
        %v1552 = vsub.s32 1, %v1551
        %v1553 = vrot.slane %v1544, %v1552
        %v1556 = vadd.f32 %v1540, %v1549
        %v1557 = vadd.f32 %v1541, %v1553
        %v1558 = vadd.f32 %v1542, %v1549
        %v1559 = vadd.f32 %v1543, %v1553
        %v1560 = vmax.f32 %v1556, 0.0
        %v1561 = vmax.f32 %v1557, 0.0
        %v1562 = vmax.f32 %v1558, 0.0
        %v1563 = vmax.f32 %v1559, 0.0
        %v1564 = vsel %vm636, %v1562, -inf
        %v1565 = vmax.f32 %v1560, %v1564
        %v1566 = vrot.slane %v1565, 4
        %v1567 = vmax.f32 %v1565, %v1566
        %v1568 = vrot.slane %v1567, 2
        %v1569 = vmax.f32 %v1567, %v1568
        %v1570 = vrot.slane %v1569, 1
        %v1571 = vmax.f32 %v1569, %v1570
        %v1572 = vsel %vm636, %v1563, -inf
        %v1573 = vmax.f32 %v1561, %v1572
        %v1574 = vrot.slane %v1573, 4
        %v1575 = vmax.f32 %v1573, %v1574
        %v1576 = vrot.slane %v1575, 2
        %v1577 = vmax.f32 %v1575, %v1576
        %v1578 = vrot.slane %v1577, 1
        %v1579 = vmax.f32 %v1577, %v1578
        %v1580 = vpack.c.bf16 %v1571, %v1571
        %v1581 = vpack.c.bf16 %v1579, %v1579
        %v1582 = vld [vmem:[%s7] sm:$0xf]
        %v1583 = vld [vmem:[%s7 + $0x4] sm:$0xf]
        %v1584 = vld [vmem:[%s7 + $0x8] sm:$0xf]
        %v1585 = vld [vmem:[%s7 + $0xc] sm:$0xf]
        %v1586 = vld [vmem:[%s7 + $0x10] sm:$0xf]
        %v1587 = vld [vmem:[%s7 + $0x14] sm:$0xf]
        %v1588 = vld [vmem:[%s7 + $0x18] sm:$0xf]
        %v1589 = vld [vmem:[%s7 + $0x1c] sm:$0xf]
        %v1590 = vld [vmem:[%s7 + $0x20] sm:$0xf]
        %v1591 = vld [vmem:[%s7 + $0x24] sm:$0xf]
        %v1592 = vld [vmem:[%s7 + $0x28] sm:$0xf]
        %v1593 = vld [vmem:[%s7 + $0x2c] sm:$0xf]
        %v1594 = vld [vmem:[%s7 + $0x30] sm:$0xf]
        %v1595 = vld [vmem:[%s7 + $0x34] sm:$0xf]
        %v1596 = vld [vmem:[%s7 + $0x38] sm:$0xf]
        %v1597 = vld [vmem:[%s7 + $0x3c] sm:$0xf]
        %v1598 = vld [vmem:[%s7 + $0x40] sm:$0xf]
        %v1599 = vld [vmem:[%s7 + $0x44] sm:$0xf]
        %v1600 = vld [vmem:[%s7 + $0x48] sm:$0xf]
        %v1601 = vld [vmem:[%s7 + $0x4c] sm:$0xf]
        %v1602 = vld [vmem:[%s7 + $0x50] sm:$0xf]
        %v1603 = vld [vmem:[%s7 + $0x54] sm:$0xf]
        %v1604 = vld [vmem:[%s7 + $0x58] sm:$0xf]
        %v1605 = vld [vmem:[%s7 + $0x5c] sm:$0xf]
        %v1606 = vld [vmem:[%s7 + $0x60] sm:$0xf]
        %v1607 = vld [vmem:[%s7 + $0x64] sm:$0xf]
        %v1608 = vld [vmem:[%s7 + $0x68] sm:$0xf]
        %v1609 = vld [vmem:[%s7 + $0x6c] sm:$0xf]
        %v1610 = vld [vmem:[%s7 + $0x70] sm:$0xf]
        %v1611 = vld [vmem:[%s7 + $0x74] sm:$0xf]
        %v1612 = vld [vmem:[%s7 + $0x78] sm:$0xf]
        %v1613 = vld [vmem:[%s7 + $0x7c] sm:$0xf]
        %v1646 = vunpack.c.l.b16 %v1582
        %v1647 = vunpack.c.l.b16 %v1583
        %v1648 = vunpack.c.l.b16 %v1584
        %v1649 = vunpack.c.l.b16 %v1585
        %v1650 = vunpack.c.l.b16 %v1586
        %v1651 = vunpack.c.l.b16 %v1587
        %v1652 = vunpack.c.l.b16 %v1588
        %v1653 = vunpack.c.l.b16 %v1589
        %v1654 = vunpack.c.l.b16 %v1590
        %v1655 = vunpack.c.l.b16 %v1591
        %v1656 = vunpack.c.l.b16 %v1592
        %v1657 = vunpack.c.l.b16 %v1593
        %v1658 = vunpack.c.l.b16 %v1594
        %v1659 = vunpack.c.l.b16 %v1595
        %v1660 = vunpack.c.l.b16 %v1596
        %v1661 = vunpack.c.l.b16 %v1597
        %v1662 = vunpack.c.l.b16 %v1598
        %v1663 = vunpack.c.l.b16 %v1599
        %v1664 = vunpack.c.l.b16 %v1600
        %v1665 = vunpack.c.l.b16 %v1601
        %v1666 = vunpack.c.l.b16 %v1602
        %v1667 = vunpack.c.l.b16 %v1603
        %v1668 = vunpack.c.l.b16 %v1604
        %v1669 = vunpack.c.l.b16 %v1605
        %v1670 = vunpack.c.l.b16 %v1606
        %v1671 = vunpack.c.l.b16 %v1607
        %v1672 = vunpack.c.l.b16 %v1608
        %v1673 = vunpack.c.l.b16 %v1609
        %v1674 = vunpack.c.l.b16 %v1610
        %v1675 = vunpack.c.l.b16 %v1611
        %v1676 = vunpack.c.l.b16 %v1612
        %v1677 = vunpack.c.l.b16 %v1613
        %v1678 = vpack.c.b16 %v1647, %v1646
        %v1679 = vpack.c.b16 %v1649, %v1648
        %v1680 = vpack.c.b16 %v1651, %v1650
        %v1681 = vpack.c.b16 %v1653, %v1652
        %v1682 = vpack.c.b16 %v1655, %v1654
        %v1683 = vpack.c.b16 %v1657, %v1656
        %v1684 = vpack.c.b16 %v1659, %v1658
        %v1685 = vpack.c.b16 %v1661, %v1660
        %v1686 = vpack.c.b16 %v1663, %v1662
        %v1687 = vpack.c.b16 %v1665, %v1664
        %v1688 = vpack.c.b16 %v1667, %v1666
        %v1689 = vpack.c.b16 %v1669, %v1668
        %v1690 = vpack.c.b16 %v1671, %v1670
        %v1691 = vpack.c.b16 %v1673, %v1672
        %v1692 = vpack.c.b16 %v1675, %v1674
        %v1693 = vpack.c.b16 %v1677, %v1676
        %1710 = vmatprep.subr.bf16.mxu0 0
        %1711 = vmatpush1.bf16.msra.mxu0 %v1685
        %1712 = vmatprep.subr.bf16.mxu0 0
        %1713 = vmatpush1.bf16.msra.mxu0 %v1684
        %1714 = vmatprep.subr.bf16.mxu0 0
        %1715 = vmatpush1.bf16.msra.mxu0 %v1683
        %1716 = vmatprep.subr.bf16.mxu0 0
        %1717 = vmatpush1.bf16.msra.mxu0 %v1682
        %1718 = vmatprep.subr.bf16.mxu0 0
        %1719 = vmatpush1.bf16.msra.mxu0 %v1681
        %1720 = vmatprep.subr.bf16.mxu0 0
        %1721 = vmatpush1.bf16.msra.mxu0 %v1680
        %1722 = vmatprep.subr.bf16.mxu0 0
        %1723 = vmatpush1.bf16.msra.mxu0 %v1679
        %1724 = vmatprep.subr.bf16.mxu0 0
        %1725 = vmatpush1.bf16.msra.mxu0 %v1678
        %1726 = vmatprep.subr.bf16.mxu0 0
        %1727 = vmatpush2.bf16.msra.mxu0 %v1693
        %1728 = vmatprep.subr.bf16.mxu0 0
        %1729 = vmatpush2.bf16.msra.mxu0 %v1692
        %1730 = vmatprep.subr.bf16.mxu0 0
        %1731 = vmatpush2.bf16.msra.mxu0 %v1691
        %1732 = vmatprep.subr.bf16.mxu0 0
        %1733 = vmatpush2.bf16.msra.mxu0 %v1690
        %1734 = vmatprep.subr.bf16.mxu0 0
        %1735 = vmatpush2.bf16.msra.mxu0 %v1689
        %1736 = vmatprep.subr.bf16.mxu0 0
        %1737 = vmatpush2.bf16.msra.mxu0 %v1688
        %1738 = vmatprep.subr.bf16.mxu0 0
        %1739 = vmatpush2.bf16.msra.mxu0 %v1687
        %1740 = vmatprep.subr.bf16.mxu0 0
        %1741 = vmatpush2.bf16.msra.mxu0 %v1686
        %1742 = vmatprep.mubr.bf16.mxu0 %v1581
        %1743 = vmatmul.mubr.bf16.gmra.mxu0 %v1580
        %v1744 = vpop.f32.mrf.mxu0
        %v1745 = vadd.f32 0.0, %v1744
        %v1746 = vpop.f32.mrf.mxu0
        %v1747 = vpop.f32.mrf.mxu0
        %v1748 = vpop.f32.mrf.mxu0
        %1749 = vdwg.mxu0
        %v1750 = vmax.f32 %v1745, 0.0
        %v1751 = vpack.c.bf16 %v1750, %v1750
        %v1752 = vld [vmem:[%s8] sm:$0xff]
        %v1753 = vld [vmem:[%s8 + $0x8] sm:$0xff]
        %v1756 = vunpack.c.l.b16 %v1752
        %v1757 = vunpack.c.h.b16 %v1752
        %v1758 = vunpack.c.l.b16 %v1753
        %v1759 = vunpack.c.h.b16 %v1753
        %v1760 = vpack.c.b16 %v1758, %v1756
        %v1761 = vpack.c.b16 %v1759, %v1757
        %vm1764 = vcmask 130048
        %v1766 = vsel %vm1764, %v1751, 0
        %1768 = vmatprep.subr.bf16.mxu0 0
        %1769 = vmatpush1.bf16.msra.mxu0 0
        %1770 = vmatprep.subr.bf16.mxu0 0
        %1771 = vmatpush1.bf16.msra.mxu0 0
        %1772 = vmatprep.subr.bf16.mxu0 0
        %1773 = vmatpush1.bf16.msra.mxu0 0
        %1774 = vmatprep.subr.bf16.mxu0 0
        %1775 = vmatpush1.bf16.msra.mxu0 0
        %1776 = vmatprep.subr.bf16.mxu0 0
        %1777 = vmatpush1.bf16.msra.mxu0 0
        %1778 = vmatprep.subr.bf16.mxu0 0
        %1779 = vmatpush1.bf16.msra.mxu0 0
        %1780 = vmatprep.subr.bf16.mxu0 0
        %1781 = vmatpush1.bf16.msra.mxu0 0
        %1782 = vmatprep.subr.bf16.mxu0 %v1761
        %1783 = vmatpush1.bf16.msra.mxu0 %v1760
        %1784 = vmatprep.subr.bf16.mxu0 0
        %1785 = vmatpush2.bf16.msra.mxu0 0
        %1786 = vmatprep.subr.bf16.mxu0 0
        %1787 = vmatpush2.bf16.msra.mxu0 0
        %1788 = vmatprep.subr.bf16.mxu0 0
        %1789 = vmatpush2.bf16.msra.mxu0 0
        %1790 = vmatprep.subr.bf16.mxu0 0
        %1791 = vmatpush2.bf16.msra.mxu0 0
        %1792 = vmatprep.subr.bf16.mxu0 0
        %1793 = vmatpush2.bf16.msra.mxu0 0
        %1794 = vmatprep.subr.bf16.mxu0 0
        %1795 = vmatpush2.bf16.msra.mxu0 0
        %1796 = vmatprep.subr.bf16.mxu0 0
        %1797 = vmatpush2.bf16.msra.mxu0 0
        %1798 = vmatprep.subr.bf16.mxu0 0
        %1799 = vmatpush2.bf16.msra.mxu0 0
        %1800 = vmatprep.mubr.bf16.mxu0 0
        %1801 = vmatmul.mubr.bf16.gmra.mxu0 %v1766
        %v1802 = vpop.f32.mrf.mxu0
        %v1803 = vadd.f32 0.0, %v1802
        %v1804 = vpop.f32.mrf.mxu0
        %v1805 = vadd.f32 0.0, %v1804
        %v1806 = vpop.f32.mrf.mxu0
        %v1807 = vpop.f32.mrf.mxu0
        %1808 = vdwg.mxu0
        %v1809 = vxor.u32 %v1803, 2147483648
        %v1810 = vxor.u32 %v1805, 2147483648
        %v1811 = vmul.f32 %v1809, 1.442695
        %v1812 = vpow.pop %v1811
        %v1813 = vmul.f32 %v1810, 1.442695
        %v1814 = vpow.pop %v1813
        %v1815 = vadd.f32 %v1812, 1.0
        %v1816 = vadd.f32 %v1814, 1.0
        %v1817 = vrcp.pop %v1815
        %v1818 = vmul.f32 1.0, %v1817
        %v1819 = vrcp.pop %v1816
        %v1820 = vmul.f32 1.0, %v1819
        %v1821 = vlaneseq
        %v1822 = vshrl.u32 %v1821, 7
        %v1823 = vsub.s32 0, %v1822
        %v1824 = vrot.slane %v1818, %v1823
        %v1825 = vlaneseq
        %v1826 = vshrl.u32 %v1825, 7
        %v1827 = vsub.s32 0, %v1826
        %v1828 = vrot.slane %v1820, %v1827
        %v1829 = vmul.f32 %v1560, %v1824
        %v1830 = vmul.f32 %v1561, %v1828
        %v1831 = vmul.f32 %v1562, %v1824
        %v1832 = vmul.f32 %v1563, %v1828
        %1833 = vst [vmem:[#allocation4] sm:$0xff] 0.0
        %1834 = vst [vmem:[#allocation4 + $0x8] sm:$0xff] 0.0
        %1835 = vst [vmem:[#allocation4 + $0x10] sm:$0xff] 0.0
        %1836 = vst [vmem:[#allocation4 + $0x18] sm:$0xff] 0.0
        %1837 = vst [vmem:[#allocation4 + $0x20] sm:$0x3] 0.0
        %1838 = vst [vmem:[#allocation4 + $0x28] sm:$0x3] 0.0
        %vm1843 = vcmask 1041408
        %v1844 = vrot.slane %v1829, 6
        %v1845 = vrot.slane %v1830, 6
        %v1846 = vrot.slane %v1831, 6
        %v1847 = vsel %vm1843, %v1844, %v1846
        %v1848 = vrot.slane %v1832, 6
        %v1849 = vsel %vm1843, %v1845, %v1848
        %1854 = vst [vmem:[#allocation4] sm:$0xfc] %v1844
        %1855 = vst [vmem:[#allocation4 + $0x8] sm:$0xfc] %v1845
        %1856 = vst [vmem:[#allocation4 + $0x10] sm:$0xff] %v1847
        %1857 = vst [vmem:[#allocation4 + $0x18] sm:$0xff] %v1849
        %v1858 = vld [vmem:[#allocation4] sm:$0xff]
        %v1859 = vld [vmem:[#allocation4 + $0x8] sm:$0xff]
        %v1860 = vld [vmem:[#allocation4 + $0x10] sm:$0xff]
        %v1861 = vld [vmem:[#allocation4 + $0x18] sm:$0xff]
        %v1862 = vpack.c.bf16 %v1860, %v1858
        %v1863 = vpack.c.bf16 %v1861, %v1859
        %v1864 = vld [vmem:[#allocation8] sm:$0xf]
        %v1865 = vld [vmem:[#allocation8 + $0x4] sm:$0xf]
        %v1866 = vld [vmem:[#allocation8 + $0x8] sm:$0xf]
        %v1867 = vld [vmem:[#allocation8 + $0xc] sm:$0xf]
        %v1868 = vld [vmem:[#allocation8 + $0x10] sm:$0xf]
        %v1869 = vld [vmem:[#allocation8 + $0x14] sm:$0xf]
        %v1870 = vld [vmem:[#allocation8 + $0x18] sm:$0xf]
        %v1871 = vld [vmem:[#allocation8 + $0x1c] sm:$0xf]
        %v1872 = vld [vmem:[#allocation8 + $0x20] sm:$0xf]
        %v1873 = vld [vmem:[#allocation8 + $0x24] sm:$0xf]
        %v1874 = vld [vmem:[#allocation8 + $0x28] sm:$0xf]
        %v1875 = vld [vmem:[#allocation8 + $0x2c] sm:$0xf]
        %v1876 = vld [vmem:[#allocation8 + $0x30] sm:$0xf]
        %v1877 = vld [vmem:[#allocation8 + $0x34] sm:$0xf]
        %v1878 = vld [vmem:[#allocation8 + $0x38] sm:$0xf]
        %v1879 = vld [vmem:[#allocation8 + $0x3c] sm:$0xf]
        %v1880 = vld [vmem:[#allocation8 + $0x40] sm:$0xf]
        %v1881 = vld [vmem:[#allocation8 + $0x44] sm:$0xf]
        %v1882 = vld [vmem:[#allocation8 + $0x48] sm:$0xf]
        %v1883 = vld [vmem:[#allocation8 + $0x4c] sm:$0xf]
        %v1884 = vld [vmem:[#allocation8 + $0x50] sm:$0xf]
        %v1885 = vld [vmem:[#allocation8 + $0x54] sm:$0xf]
        %v1886 = vld [vmem:[#allocation8 + $0x58] sm:$0xf]
        %v1887 = vld [vmem:[#allocation8 + $0x5c] sm:$0xf]
        %v1888 = vld [vmem:[#allocation8 + $0x60] sm:$0xf]
        %v1889 = vld [vmem:[#allocation8 + $0x64] sm:$0xf]
        %v1890 = vld [vmem:[#allocation8 + $0x68] sm:$0xf]
        %v1891 = vld [vmem:[#allocation8 + $0x6c] sm:$0xf]
        %v1892 = vld [vmem:[#allocation8 + $0x70] sm:$0xf]
        %v1893 = vld [vmem:[#allocation8 + $0x74] sm:$0xf]
        %v1894 = vld [vmem:[#allocation8 + $0x78] sm:$0xf]
        %v1895 = vld [vmem:[#allocation8 + $0x7c] sm:$0xf]
        %v1896 = vld [vmem:[#allocation4] sm:$0xfe]
        %v1897 = vld [vmem:[#allocation4 + $0x8] sm:$0xfe]
        %v1898 = vld [vmem:[#allocation4 + $0x20] sm:$0x1]
        %v1899 = vld [vmem:[#allocation4 + $0x28] sm:$0x1]
        %v1900 = vpack.c.bf16 %v1860, %v1896
        %v1901 = vpack.c.bf16 %v1861, %v1897
        %v1902 = vpack.c.bf16 %v1898, %v1898
        %v1903 = vpack.c.bf16 %v1899, %v1899
        %s1904 = scalar_lea.vmem [#allocation8], 128
        %v1905 = vld [vmem:[%s1904] sm:$0xf]
        %v1906 = vld [vmem:[%s1904 + $0x4] sm:$0xf]
        %v1907 = vld [vmem:[%s1904 + $0x8] sm:$0xf]
        %v1908 = vld [vmem:[%s1904 + $0xc] sm:$0xf]
        %v1909 = vld [vmem:[%s1904 + $0x10] sm:$0xf]
        %v1910 = vld [vmem:[%s1904 + $0x14] sm:$0xf]
        %v1911 = vld [vmem:[%s1904 + $0x18] sm:$0xf]
        %v1912 = vld [vmem:[%s1904 + $0x1c] sm:$0xf]
        %v1913 = vld [vmem:[%s1904 + $0x20] sm:$0xf]
        %v1914 = vld [vmem:[%s1904 + $0x24] sm:$0xf]
        %v1915 = vld [vmem:[%s1904 + $0x28] sm:$0xf]
        %v1916 = vld [vmem:[%s1904 + $0x2c] sm:$0xf]
        %v1917 = vld [vmem:[%s1904 + $0x30] sm:$0xf]
        %v1918 = vld [vmem:[%s1904 + $0x34] sm:$0xf]
        %v1919 = vld [vmem:[%s1904 + $0x38] sm:$0xf]
        %v1920 = vld [vmem:[%s1904 + $0x3c] sm:$0xf]
        %v1921 = vld [vmem:[%s1904 + $0x40] sm:$0xf]
        %v1922 = vld [vmem:[%s1904 + $0x44] sm:$0xf]
        %v1923 = vld [vmem:[%s1904 + $0x48] sm:$0xf]
        %v1924 = vld [vmem:[%s1904 + $0x4c] sm:$0xf]
        %v1925 = vld [vmem:[%s1904 + $0x50] sm:$0xf]
        %v1926 = vld [vmem:[%s1904 + $0x54] sm:$0xf]
        %v1927 = vld [vmem:[%s1904 + $0x58] sm:$0xf]
        %v1928 = vld [vmem:[%s1904 + $0x5c] sm:$0xf]
        %v1929 = vld [vmem:[%s1904 + $0x60] sm:$0xf]
        %v1930 = vld [vmem:[%s1904 + $0x64] sm:$0xf]
        %v1931 = vld [vmem:[%s1904 + $0x68] sm:$0xf]
        %v1932 = vld [vmem:[%s1904 + $0x6c] sm:$0xf]
        %v1933 = vld [vmem:[%s1904 + $0x70] sm:$0xf]
        %v1934 = vld [vmem:[%s1904 + $0x74] sm:$0xf]
        %v1935 = vld [vmem:[%s1904 + $0x78] sm:$0xf]
        %v1936 = vld [vmem:[%s1904 + $0x7c] sm:$0xf]
        %vm1937 = vsmask.f32 7424
        %v1939 = vshrl.u32 %v1900, 16
        %v1941 = vshll.u32 %v1900, 16
        %v1943 = vrot.slane %v1941, 1
        %v1944 = vor.u32 %v1939, %v1943
        %v1946 = vshll.u32 %v1902, 16
        %v1948 = vrot.slane %v1946, 1
        %v1949 = vsel %vm1937, %v1944, %v1948
        %v1951 = vshrl.u32 %v1901, 16
        %v1953 = vshll.u32 %v1901, 16
        %v1955 = vrot.slane %v1953, 1
        %v1956 = vor.u32 %v1951, %v1955
        %v1958 = vshll.u32 %v1903, 16
        %v1960 = vrot.slane %v1958, 1
        %v1961 = vsel %vm1937, %v1956, %v1960
        %v1996 = vunpack.c.l.b16 %v1905
        %v1997 = vunpack.c.l.b16 %v1906
        %v1998 = vunpack.c.l.b16 %v1907
        %v1999 = vunpack.c.l.b16 %v1908
        %v2000 = vunpack.c.l.b16 %v1909
        %v2001 = vunpack.c.l.b16 %v1910
        %v2002 = vunpack.c.l.b16 %v1911
        %v2003 = vunpack.c.l.b16 %v1912
        %v2004 = vunpack.c.l.b16 %v1913
        %v2005 = vunpack.c.l.b16 %v1914
        %v2006 = vunpack.c.l.b16 %v1915
        %v2007 = vunpack.c.l.b16 %v1916
        %v2008 = vunpack.c.l.b16 %v1917
        %v2009 = vunpack.c.l.b16 %v1918
        %v2010 = vunpack.c.l.b16 %v1919
        %v2011 = vunpack.c.l.b16 %v1920
        %v2012 = vunpack.c.l.b16 %v1921
        %v2013 = vunpack.c.l.b16 %v1922
        %v2014 = vunpack.c.l.b16 %v1923
        %v2015 = vunpack.c.l.b16 %v1924
        %v2016 = vunpack.c.l.b16 %v1925
        %v2017 = vunpack.c.l.b16 %v1926
        %v2018 = vunpack.c.l.b16 %v1927
        %v2019 = vunpack.c.l.b16 %v1928
        %v2020 = vunpack.c.l.b16 %v1929
        %v2021 = vunpack.c.l.b16 %v1930
        %v2022 = vunpack.c.l.b16 %v1931
        %v2023 = vunpack.c.l.b16 %v1932
        %v2024 = vunpack.c.l.b16 %v1933
        %v2025 = vunpack.c.l.b16 %v1934
        %v2026 = vunpack.c.l.b16 %v1935
        %v2027 = vunpack.c.l.b16 %v1936
        %v2028 = vpack.c.b16 %v1997, %v1996
        %v2029 = vpack.c.b16 %v1999, %v1998
        %v2030 = vpack.c.b16 %v2001, %v2000
        %v2031 = vpack.c.b16 %v2003, %v2002
        %v2032 = vpack.c.b16 %v2005, %v2004
        %v2033 = vpack.c.b16 %v2007, %v2006
        %v2034 = vpack.c.b16 %v2009, %v2008
        %v2035 = vpack.c.b16 %v2011, %v2010
        %v2036 = vpack.c.b16 %v2013, %v2012
        %v2037 = vpack.c.b16 %v2015, %v2014
        %v2038 = vpack.c.b16 %v2017, %v2016
        %v2039 = vpack.c.b16 %v2019, %v2018
        %v2040 = vpack.c.b16 %v2021, %v2020
        %v2041 = vpack.c.b16 %v2023, %v2022
        %v2042 = vpack.c.b16 %v2025, %v2024
        %v2043 = vpack.c.b16 %v2027, %v2026
        %2060 = vmatprep.subr.bf16.mxu0 0
        %2061 = vmatpush1.bf16.msra.mxu0 %v2035
        %2062 = vmatprep.subr.bf16.mxu0 0
        %2063 = vmatpush1.bf16.msra.mxu0 %v2034
        %2064 = vmatprep.subr.bf16.mxu0 0
        %2065 = vmatpush1.bf16.msra.mxu0 %v2033
        %2066 = vmatprep.subr.bf16.mxu0 0
        %2067 = vmatpush1.bf16.msra.mxu0 %v2032
        %2068 = vmatprep.subr.bf16.mxu0 0
        %2069 = vmatpush1.bf16.msra.mxu0 %v2031
        %2070 = vmatprep.subr.bf16.mxu0 0
        %2071 = vmatpush1.bf16.msra.mxu0 %v2030
        %2072 = vmatprep.subr.bf16.mxu0 0
        %2073 = vmatpush1.bf16.msra.mxu0 %v2029
        %2074 = vmatprep.subr.bf16.mxu0 0
        %2075 = vmatpush1.bf16.msra.mxu0 %v2028
        %2076 = vmatprep.subr.bf16.mxu0 0
        %2077 = vmatpush2.bf16.msra.mxu0 %v2043
        %2078 = vmatprep.subr.bf16.mxu0 0
        %2079 = vmatpush2.bf16.msra.mxu0 %v2042
        %2080 = vmatprep.subr.bf16.mxu0 0
        %2081 = vmatpush2.bf16.msra.mxu0 %v2041
        %2082 = vmatprep.subr.bf16.mxu0 0
        %2083 = vmatpush2.bf16.msra.mxu0 %v2040
        %2084 = vmatprep.subr.bf16.mxu0 0
        %2085 = vmatpush2.bf16.msra.mxu0 %v2039
        %2086 = vmatprep.subr.bf16.mxu0 0
        %2087 = vmatpush2.bf16.msra.mxu0 %v2038
        %2088 = vmatprep.subr.bf16.mxu0 0
        %2089 = vmatpush2.bf16.msra.mxu0 %v2037
        %2090 = vmatprep.subr.bf16.mxu0 0
        %2091 = vmatpush2.bf16.msra.mxu0 %v2036
        %2092 = vmatprep.mubr.bf16.mxu0 %v1961
        %2093 = vmatmul.mubr.bf16.gmra.mxu0 %v1949
        %v2094 = vpop.f32.mrf.mxu0
        %v2095 = vadd.f32 0.0, %v2094
        %v2096 = vpop.f32.mrf.mxu0
        %v2097 = vpop.f32.mrf.mxu0
        %v2098 = vadd.f32 0.0, %v2097
        %v2099 = vpop.f32.mrf.mxu0
        %2100 = vdwg.mxu0
        %v2133 = vunpack.c.l.b16 %v1864
        %v2134 = vunpack.c.l.b16 %v1865
        %v2135 = vunpack.c.l.b16 %v1866
        %v2136 = vunpack.c.l.b16 %v1867
        %v2137 = vunpack.c.l.b16 %v1868
        %v2138 = vunpack.c.l.b16 %v1869
        %v2139 = vunpack.c.l.b16 %v1870
        %v2140 = vunpack.c.l.b16 %v1871
        %v2141 = vunpack.c.l.b16 %v1872
        %v2142 = vunpack.c.l.b16 %v1873
        %v2143 = vunpack.c.l.b16 %v1874
        %v2144 = vunpack.c.l.b16 %v1875
        %v2145 = vunpack.c.l.b16 %v1876
        %v2146 = vunpack.c.l.b16 %v1877
        %v2147 = vunpack.c.l.b16 %v1878
        %v2148 = vunpack.c.l.b16 %v1879
        %v2149 = vunpack.c.l.b16 %v1880
        %v2150 = vunpack.c.l.b16 %v1881
        %v2151 = vunpack.c.l.b16 %v1882
        %v2152 = vunpack.c.l.b16 %v1883
        %v2153 = vunpack.c.l.b16 %v1884
        %v2154 = vunpack.c.l.b16 %v1885
        %v2155 = vunpack.c.l.b16 %v1886
        %v2156 = vunpack.c.l.b16 %v1887
        %v2157 = vunpack.c.l.b16 %v1888
        %v2158 = vunpack.c.l.b16 %v1889
        %v2159 = vunpack.c.l.b16 %v1890
        %v2160 = vunpack.c.l.b16 %v1891
        %v2161 = vunpack.c.l.b16 %v1892
        %v2162 = vunpack.c.l.b16 %v1893
        %v2163 = vunpack.c.l.b16 %v1894
        %v2164 = vunpack.c.l.b16 %v1895
        %v2165 = vpack.c.b16 %v2134, %v2133
        %v2166 = vpack.c.b16 %v2136, %v2135
        %v2167 = vpack.c.b16 %v2138, %v2137
        %v2168 = vpack.c.b16 %v2140, %v2139
        %v2169 = vpack.c.b16 %v2142, %v2141
        %v2170 = vpack.c.b16 %v2144, %v2143
        %v2171 = vpack.c.b16 %v2146, %v2145
        %v2172 = vpack.c.b16 %v2148, %v2147
        %v2173 = vpack.c.b16 %v2150, %v2149
        %v2174 = vpack.c.b16 %v2152, %v2151
        %v2175 = vpack.c.b16 %v2154, %v2153
        %v2176 = vpack.c.b16 %v2156, %v2155
        %v2177 = vpack.c.b16 %v2158, %v2157
        %v2178 = vpack.c.b16 %v2160, %v2159
        %v2179 = vpack.c.b16 %v2162, %v2161
        %v2180 = vpack.c.b16 %v2164, %v2163
        %2197 = vmatprep.subr.bf16.mxu0 0
        %2198 = vmatpush1.bf16.msra.mxu0 %v2172
        %2199 = vmatprep.subr.bf16.mxu0 0
        %2200 = vmatpush1.bf16.msra.mxu0 %v2171
        %2201 = vmatprep.subr.bf16.mxu0 0
        %2202 = vmatpush1.bf16.msra.mxu0 %v2170
        %2203 = vmatprep.subr.bf16.mxu0 0
        %2204 = vmatpush1.bf16.msra.mxu0 %v2169
        %2205 = vmatprep.subr.bf16.mxu0 0
        %2206 = vmatpush1.bf16.msra.mxu0 %v2168
        %2207 = vmatprep.subr.bf16.mxu0 0
        %2208 = vmatpush1.bf16.msra.mxu0 %v2167
        %2209 = vmatprep.subr.bf16.mxu0 0
        %2210 = vmatpush1.bf16.msra.mxu0 %v2166
        %2211 = vmatprep.subr.bf16.mxu0 0
        %2212 = vmatpush1.bf16.msra.mxu0 %v2165
        %2213 = vmatprep.subr.bf16.mxu0 0
        %2214 = vmatpush2.bf16.msra.mxu0 %v2180
        %2215 = vmatprep.subr.bf16.mxu0 0
        %2216 = vmatpush2.bf16.msra.mxu0 %v2179
        %2217 = vmatprep.subr.bf16.mxu0 0
        %2218 = vmatpush2.bf16.msra.mxu0 %v2178
        %2219 = vmatprep.subr.bf16.mxu0 0
        %2220 = vmatpush2.bf16.msra.mxu0 %v2177
        %2221 = vmatprep.subr.bf16.mxu0 0
        %2222 = vmatpush2.bf16.msra.mxu0 %v2176
        %2223 = vmatprep.subr.bf16.mxu0 0
        %2224 = vmatpush2.bf16.msra.mxu0 %v2175
        %2225 = vmatprep.subr.bf16.mxu0 0
        %2226 = vmatpush2.bf16.msra.mxu0 %v2174
        %2227 = vmatprep.subr.bf16.mxu0 0
        %2228 = vmatpush2.bf16.msra.mxu0 %v2173
        %2229 = vmatprep.mubr.bf16.mxu0 %v1863
        %2230 = vmatmul.mubr.bf16.gmra.mxu0 %v1862
        %v2231 = vpop.f32.mrf.mxu0
        %v2232 = vadd.f32 %v2095, %v2231
        %v2233 = vpop.f32.mrf.mxu0
        %v2234 = vpop.f32.mrf.mxu0
        %v2235 = vadd.f32 %v2098, %v2234
        %v2236 = vpop.f32.mrf.mxu0
        %2237 = vdwg.mxu0
        %v2238 = vld [vmem:[#allocation4] sm:$0xfc]
        %v2239 = vld [vmem:[#allocation4 + $0x8] sm:$0xfc]
        %v2240 = vld [vmem:[#allocation4 + $0x20] sm:$0x3]
        %v2241 = vld [vmem:[#allocation4 + $0x28] sm:$0x3]
        %v2242 = vpack.c.bf16 %v1860, %v2238
        %v2243 = vpack.c.bf16 %v1861, %v2239
        %v2244 = vpack.c.bf16 %v2240, %v2240
        %v2245 = vpack.c.bf16 %v2241, %v2241
        %s2246 = scalar_lea.vmem [#allocation8], 256
        %v2247 = vld [vmem:[%s2246] sm:$0xf]
        %v2248 = vld [vmem:[%s2246 + $0x4] sm:$0xf]
        %v2249 = vld [vmem:[%s2246 + $0x8] sm:$0xf]
        %v2250 = vld [vmem:[%s2246 + $0xc] sm:$0xf]
        %v2251 = vld [vmem:[%s2246 + $0x10] sm:$0xf]
        %v2252 = vld [vmem:[%s2246 + $0x14] sm:$0xf]
        %v2253 = vld [vmem:[%s2246 + $0x18] sm:$0xf]
        %v2254 = vld [vmem:[%s2246 + $0x1c] sm:$0xf]
        %v2255 = vld [vmem:[%s2246 + $0x20] sm:$0xf]
        %v2256 = vld [vmem:[%s2246 + $0x24] sm:$0xf]
        %v2257 = vld [vmem:[%s2246 + $0x28] sm:$0xf]
        %v2258 = vld [vmem:[%s2246 + $0x2c] sm:$0xf]
        %v2259 = vld [vmem:[%s2246 + $0x30] sm:$0xf]
        %v2260 = vld [vmem:[%s2246 + $0x34] sm:$0xf]
        %v2261 = vld [vmem:[%s2246 + $0x38] sm:$0xf]
        %v2262 = vld [vmem:[%s2246 + $0x3c] sm:$0xf]
        %v2263 = vld [vmem:[%s2246 + $0x40] sm:$0xf]
        %v2264 = vld [vmem:[%s2246 + $0x44] sm:$0xf]
        %v2265 = vld [vmem:[%s2246 + $0x48] sm:$0xf]
        %v2266 = vld [vmem:[%s2246 + $0x4c] sm:$0xf]
        %v2267 = vld [vmem:[%s2246 + $0x50] sm:$0xf]
        %v2268 = vld [vmem:[%s2246 + $0x54] sm:$0xf]
        %v2269 = vld [vmem:[%s2246 + $0x58] sm:$0xf]
        %v2270 = vld [vmem:[%s2246 + $0x5c] sm:$0xf]
        %v2271 = vld [vmem:[%s2246 + $0x60] sm:$0xf]
        %v2272 = vld [vmem:[%s2246 + $0x64] sm:$0xf]
        %v2273 = vld [vmem:[%s2246 + $0x68] sm:$0xf]
        %v2274 = vld [vmem:[%s2246 + $0x6c] sm:$0xf]
        %v2275 = vld [vmem:[%s2246 + $0x70] sm:$0xf]
        %v2276 = vld [vmem:[%s2246 + $0x74] sm:$0xf]
        %v2277 = vld [vmem:[%s2246 + $0x78] sm:$0xf]
        %v2278 = vld [vmem:[%s2246 + $0x7c] sm:$0xf]
        %vm2283 = vcmask 1046528
        %v2284 = vrot.slane %v2242, 1
        %v2285 = vrot.slane %v2244, 1
        %v2286 = vsel %vm2283, %v2284, %v2285
        %v2287 = vrot.slane %v2243, 1
        %v2288 = vrot.slane %v2245, 1
        %v2289 = vsel %vm2283, %v2287, %v2288
        %v2324 = vunpack.c.l.b16 %v2247
        %v2325 = vunpack.c.l.b16 %v2248
        %v2326 = vunpack.c.l.b16 %v2249
        %v2327 = vunpack.c.l.b16 %v2250
        %v2328 = vunpack.c.l.b16 %v2251
        %v2329 = vunpack.c.l.b16 %v2252
        %v2330 = vunpack.c.l.b16 %v2253
        %v2331 = vunpack.c.l.b16 %v2254
        %v2332 = vunpack.c.l.b16 %v2255
        %v2333 = vunpack.c.l.b16 %v2256
        %v2334 = vunpack.c.l.b16 %v2257
        %v2335 = vunpack.c.l.b16 %v2258
        %v2336 = vunpack.c.l.b16 %v2259
        %v2337 = vunpack.c.l.b16 %v2260
        %v2338 = vunpack.c.l.b16 %v2261
        %v2339 = vunpack.c.l.b16 %v2262
        %v2340 = vunpack.c.l.b16 %v2263
        %v2341 = vunpack.c.l.b16 %v2264
        %v2342 = vunpack.c.l.b16 %v2265
        %v2343 = vunpack.c.l.b16 %v2266
        %v2344 = vunpack.c.l.b16 %v2267
        %v2345 = vunpack.c.l.b16 %v2268
        %v2346 = vunpack.c.l.b16 %v2269
        %v2347 = vunpack.c.l.b16 %v2270
        %v2348 = vunpack.c.l.b16 %v2271
        %v2349 = vunpack.c.l.b16 %v2272
        %v2350 = vunpack.c.l.b16 %v2273
        %v2351 = vunpack.c.l.b16 %v2274
        %v2352 = vunpack.c.l.b16 %v2275
        %v2353 = vunpack.c.l.b16 %v2276
        %v2354 = vunpack.c.l.b16 %v2277
        %v2355 = vunpack.c.l.b16 %v2278
        %v2356 = vpack.c.b16 %v2325, %v2324
        %v2357 = vpack.c.b16 %v2327, %v2326
        %v2358 = vpack.c.b16 %v2329, %v2328
        %v2359 = vpack.c.b16 %v2331, %v2330
        %v2360 = vpack.c.b16 %v2333, %v2332
        %v2361 = vpack.c.b16 %v2335, %v2334
        %v2362 = vpack.c.b16 %v2337, %v2336
        %v2363 = vpack.c.b16 %v2339, %v2338
        %v2364 = vpack.c.b16 %v2341, %v2340
        %v2365 = vpack.c.b16 %v2343, %v2342
        %v2366 = vpack.c.b16 %v2345, %v2344
        %v2367 = vpack.c.b16 %v2347, %v2346
        %v2368 = vpack.c.b16 %v2349, %v2348
        %v2369 = vpack.c.b16 %v2351, %v2350
        %v2370 = vpack.c.b16 %v2353, %v2352
        %v2371 = vpack.c.b16 %v2355, %v2354
        %2388 = vmatprep.subr.bf16.mxu0 0
        %2389 = vmatpush1.bf16.msra.mxu0 %v2363
        %2390 = vmatprep.subr.bf16.mxu0 0
        %2391 = vmatpush1.bf16.msra.mxu0 %v2362
        %2392 = vmatprep.subr.bf16.mxu0 0
        %2393 = vmatpush1.bf16.msra.mxu0 %v2361
        %2394 = vmatprep.subr.bf16.mxu0 0
        %2395 = vmatpush1.bf16.msra.mxu0 %v2360
        %2396 = vmatprep.subr.bf16.mxu0 0
        %2397 = vmatpush1.bf16.msra.mxu0 %v2359
        %2398 = vmatprep.subr.bf16.mxu0 0
        %2399 = vmatpush1.bf16.msra.mxu0 %v2358
        %2400 = vmatprep.subr.bf16.mxu0 0
        %2401 = vmatpush1.bf16.msra.mxu0 %v2357
        %2402 = vmatprep.subr.bf16.mxu0 0
        %2403 = vmatpush1.bf16.msra.mxu0 %v2356
        %2404 = vmatprep.subr.bf16.mxu0 0
        %2405 = vmatpush2.bf16.msra.mxu0 %v2371
        %2406 = vmatprep.subr.bf16.mxu0 0
        %2407 = vmatpush2.bf16.msra.mxu0 %v2370
        %2408 = vmatprep.subr.bf16.mxu0 0
        %2409 = vmatpush2.bf16.msra.mxu0 %v2369
        %2410 = vmatprep.subr.bf16.mxu0 0
        %2411 = vmatpush2.bf16.msra.mxu0 %v2368
        %2412 = vmatprep.subr.bf16.mxu0 0
        %2413 = vmatpush2.bf16.msra.mxu0 %v2367
        %2414 = vmatprep.subr.bf16.mxu0 0
        %2415 = vmatpush2.bf16.msra.mxu0 %v2366
        %2416 = vmatprep.subr.bf16.mxu0 0
        %2417 = vmatpush2.bf16.msra.mxu0 %v2365
        %2418 = vmatprep.subr.bf16.mxu0 0
        %2419 = vmatpush2.bf16.msra.mxu0 %v2364
        %2420 = vmatprep.mubr.bf16.mxu0 %v2289
        %2421 = vmatmul.mubr.bf16.gmra.mxu0 %v2286
        %v2422 = vpop.f32.mrf.mxu0
        %v2423 = vadd.f32 0.0, %v2422
        %v2424 = vpop.f32.mrf.mxu0
        %v2425 = vpop.f32.mrf.mxu0
        %v2426 = vadd.f32 0.0, %v2425
        %v2427 = vpop.f32.mrf.mxu0
        %2428 = vdwg.mxu0
        %v2429 = vadd.f32 %v2232, %v2423
        %v2430 = vadd.f32 %v2235, %v2426
        %v2431 = vld [vmem:[%s10] sm:$0x1]
        %v2433 = vlaneseq
        %v2434 = vshrl.u32 %v2433, 7
        %v2435 = vsub.s32 0, %v2434
        %v2436 = vrot.slane %v2431, %v2435
        %v2438 = vadd.f32 %v2429, %v2436
        %v2439 = vadd.f32 %v2430, %v2436
        %v2440 = vmax.f32 %v2438, 0.0
        %v2441 = vmax.f32 %v2439, 0.0
        %v2442 = vadd.f32 %v2440, %v2441
        %v2443 = vrot.slane %v2442, 4
        %v2444 = vadd.f32 %v2442, %v2443
        %v2445 = vrot.slane %v2444, 2
        %v2446 = vadd.f32 %v2444, %v2445
        %v2447 = vrot.slane %v2446, 1
        %v2448 = vadd.f32 %v2446, %v2447
        %v2449 = vrcp.pop 16.0
        %v2450 = vmul.f32 %v2448, %v2449
        %v2451 = vpack.c.bf16 %v2450, %v2450
        %v2452 = vld [vmem:[%s11] sm:$0xf]
        %v2453 = vld [vmem:[%s11 + $0x4] sm:$0xf]
        %v2454 = vld [vmem:[%s11 + $0x8] sm:$0xf]
        %v2455 = vld [vmem:[%s11 + $0xc] sm:$0xf]
        %v2456 = vld [vmem:[%s11 + $0x10] sm:$0xf]
        %v2457 = vld [vmem:[%s11 + $0x14] sm:$0xf]
        %v2458 = vld [vmem:[%s11 + $0x18] sm:$0xf]
        %v2459 = vld [vmem:[%s11 + $0x1c] sm:$0xf]
        %v2460 = vld [vmem:[%s11 + $0x20] sm:$0xf]
        %v2461 = vld [vmem:[%s11 + $0x24] sm:$0xf]
        %v2462 = vld [vmem:[%s11 + $0x28] sm:$0xf]
        %v2463 = vld [vmem:[%s11 + $0x2c] sm:$0xf]
        %v2464 = vld [vmem:[%s11 + $0x30] sm:$0xf]
        %v2465 = vld [vmem:[%s11 + $0x34] sm:$0xf]
        %v2466 = vld [vmem:[%s11 + $0x38] sm:$0xf]
        %v2467 = vld [vmem:[%s11 + $0x3c] sm:$0xf]
        %v2468 = vld [vmem:[%s12] sm:$0x1]
        %v2485 = vunpack.c.l.b16 %v2452
        %v2486 = vunpack.c.l.b16 %v2453
        %v2487 = vunpack.c.l.b16 %v2454
        %v2488 = vunpack.c.l.b16 %v2455
        %v2489 = vunpack.c.l.b16 %v2456
        %v2490 = vunpack.c.l.b16 %v2457
        %v2491 = vunpack.c.l.b16 %v2458
        %v2492 = vunpack.c.l.b16 %v2459
        %v2493 = vunpack.c.l.b16 %v2460
        %v2494 = vunpack.c.l.b16 %v2461
        %v2495 = vunpack.c.l.b16 %v2462
        %v2496 = vunpack.c.l.b16 %v2463
        %v2497 = vunpack.c.l.b16 %v2464
        %v2498 = vunpack.c.l.b16 %v2465
        %v2499 = vunpack.c.l.b16 %v2466
        %v2500 = vunpack.c.l.b16 %v2467
        %v2501 = vpack.c.b16 %v2486, %v2485
        %v2502 = vpack.c.b16 %v2488, %v2487
        %v2503 = vpack.c.b16 %v2490, %v2489
        %v2504 = vpack.c.b16 %v2492, %v2491
        %v2505 = vpack.c.b16 %v2494, %v2493
        %v2506 = vpack.c.b16 %v2496, %v2495
        %v2507 = vpack.c.b16 %v2498, %v2497
        %v2508 = vpack.c.b16 %v2500, %v2499
        %2517 = vmatprep.subr.bf16.mxu0 0
        %2518 = vmatpush1.bf16.msra.mxu0 %v2508
        %2519 = vmatprep.subr.bf16.mxu0 0
        %2520 = vmatpush1.bf16.msra.mxu0 %v2507
        %2521 = vmatprep.subr.bf16.mxu0 0
        %2522 = vmatpush1.bf16.msra.mxu0 %v2506
        %2523 = vmatprep.subr.bf16.mxu0 0
        %2524 = vmatpush1.bf16.msra.mxu0 %v2505
        %2525 = vmatprep.subr.bf16.mxu0 0
        %2526 = vmatpush1.bf16.msra.mxu0 %v2504
        %2527 = vmatprep.subr.bf16.mxu0 0
        %2528 = vmatpush1.bf16.msra.mxu0 %v2503
        %2529 = vmatprep.subr.bf16.mxu0 0
        %2530 = vmatpush1.bf16.msra.mxu0 %v2502
        %2531 = vmatprep.subr.bf16.mxu0 0
        %2532 = vmatpush1.bf16.msra.mxu0 %v2501
        %2533 = vmatprep.subr.bf16.mxu0 0
        %2534 = vmatpush2.bf16.msra.mxu0 0
        %2535 = vmatprep.subr.bf16.mxu0 0
        %2536 = vmatpush2.bf16.msra.mxu0 0
        %2537 = vmatprep.subr.bf16.mxu0 0
        %2538 = vmatpush2.bf16.msra.mxu0 0
        %2539 = vmatprep.subr.bf16.mxu0 0
        %2540 = vmatpush2.bf16.msra.mxu0 0
        %2541 = vmatprep.subr.bf16.mxu0 0
        %2542 = vmatpush2.bf16.msra.mxu0 0
        %2543 = vmatprep.subr.bf16.mxu0 0
        %2544 = vmatpush2.bf16.msra.mxu0 0
        %2545 = vmatprep.subr.bf16.mxu0 0
        %2546 = vmatpush2.bf16.msra.mxu0 0
        %2547 = vmatprep.subr.bf16.mxu0 0
        %2548 = vmatpush2.bf16.msra.mxu0 0
        %2549 = vmatprep.mubr.bf16.mxu0 0
        %2550 = vmatmul.mubr.bf16.gmra.mxu0 %v2451
        %v2551 = vpop.f32.mrf.mxu0
        %v2552 = vadd.f32 %v2468, %v2551
        %v2553 = vpop.f32.mrf.mxu0
        %v2554 = vpop.f32.mrf.mxu0
        %v2555 = vpop.f32.mrf.mxu0
        %2556 = vdwg.mxu0
        %vm2557 = vcmask 73728
        %v2558 = vsel %vm2557, %v2552, -inf
        %2559 = vmax.xlane.f32.xlu0 %v2558
        %v2560 = vpop.xlane.xlu0 %2559
        %v2561 = vsub.f32 %v2552, %v2560
        %v2562 = vmul.f32 %v2561, 1.442695
        %v2563 = vpow.pop %v2562
        %v2564 = vsel %vm2557, %v2563, 0.0
        %2565 = vadd.xlane.f32.xlu0 %v2564
        %v2566 = vpop.xlane.xlu0 %2565
        %v2567 = vlog2.pop %v2566
        %v2568 = vmul.f32 %v2567, 0.6931472
        %v2569 = vadd.f32 %v2560, %v2568
        %v2570 = vsub.f32 %v2552, %v2569
        %2571 = vst.msk [vmem:[%s462] sm:$0x1] %vm2557, %v2570
        %s2572 = sand.u32 %s315, 1
        %s2573 = scalar_lea.sflag [#allocation7], %s2572
        %s2574 = sand.u32 %s315, 1
        %s2575 = scalar_lea.vmem [#allocation10], %s2574
        // Predicated region
        $region81: #{mlstm_forward.1} parent=71 // pred_check
          %p2576 = pneg %p325
        $region82: #{mlstm_forward.1} parent=71 // pred_check_branch
          %2578 = sbr.rel (%p2576) target = $region84
        $region83: #{mlstm_forward.1} parent=71 // pred_region
          %s2580 = ssub.s32 16, 16
          %2581 = vsyncadd %s2573, %s2580
          %s2582 = smul.addr %s29, 16
          %s2583 = scalar_lea.hbm %s13, %s2582
          %s2585 = sshll.u32 %s2575, 4
          %s2586 = int_to_ptr.vmem [resolvable:$true] %s2585
          %2588 = dma.vmem_to_hbm [thread:$0]  %s2586, 16, %s2583, %s2573
        $region84: #{mlstm_forward.1} parent=71 // pred_fallthru
          _
      $region72: #{mlstm_forward.1} parent=5 // pred_fallthru
        _
      %p2589 = scmp.le.s32.totalorder 2, %s24
      // Predicated region
      $region85: #{mlstm_forward.1} parent=5 // pred_check
        %p2590 = pneg %p2589
      $region86: #{mlstm_forward.1} parent=5 // pred_check_branch
        %2592 = sbr.rel (%p2590) target = $region88
      $region87: #{mlstm_forward.1} parent=5 // pred_region
        %s2593 = ssub.s32 %s24, 2
        // Predicated region
        $region89: #{mlstm_forward.1} parent=87 // pred_check
          %p2594 = pneg %p331
        $region90: #{mlstm_forward.1} parent=87 // pred_check_branch
          %2596 = sbr.rel (%p2594) target = $region92
        $region91: #{mlstm_forward.1} parent=87 // pred_region
          %s2597 = sand.u32 %s316, 1
          %s2598 = scalar_lea.sflag [#allocation7], %s2597
          %s2599 = sand.u32 %s316, 1
          %s2600 = scalar_lea.vmem [#allocation10], %s2599
          %2601 = dma.done %s2598, 16
        $region92: #{mlstm_forward.1} parent=87 // pred_fallthru
          _
      $region88: #{mlstm_forward.1} parent=5 // pred_fallthru
        _
    $region6: #{mlstm_forward.1} parent=1 // loop_footer
      %s28 = sadd.s32 1, %s24
    $region7: #{mlstm_forward.1} parent=1 // loop_footer_branch
      %23 = sbr.rel target = $region3
    $region8: #{mlstm_forward.1} parent=1 // loop_exit
      _
    %2602 = vsyncpa [#allocation6], 1
    %s2603 = scalar_lea.sflag [#allocation6], 1
    %2604 = vsyncpa %s2603, 1
    %2605 = vsyncpa [#allocation9], 1
    %2606 = vsyncpa [#allocation7], 1
    %s2607 = scalar_lea.sflag [#allocation7], 1
    %2608 = vsyncpa %s2607, 1

</llo_original>
